<compile_context>
chip_gen: v7x
topology: tpu7x:2x2x1
jax: 0.10.0
libtpu: 0.0.40
codegen_flags: <defaults>
</compile_context>

<pallas_src>
import jax
import jax.numpy as jnp
from jax.experimental import pallas as pl
from jax.experimental.pallas import tpu as pltpu

LAYER_DIMS = [(4, 256), (256, 256), (256, 256), (256, 256),
              (256, 16), (16, 8), (8, 8), (8, 2)]


def onnxnet_kernel(x_ref,
                   w0, b0, w1, b1, w2, b2, w3, b3, w4, b4,
                   w5, b5, w6, b6,
                   wh, bh, xh,
                   out_ref):
    x = x_ref[...]  # (TM, 4) f32

    def dense_mxu(h, w_ref, b_ref):
        # MXU matmul.  Weights may be bf16 (pre-cast once in prep_params);
        # activations are cast to the weight dtype right before the dot and
        # accumulation / bias / ReLU stay in f32 (no bf16 VPU math -> v5e-safe).
        w = w_ref[...]
        y = jnp.dot(h.astype(w.dtype), w,
                    preferred_element_type=jnp.float32) + b_ref[...]
        return jnp.maximum(y, 0.0)

    def dense_vpu(h, w_ref, b_ref, relu=True):
        # Small-K layer as statically unrolled VPU broadcast MACs (f32); keeps
        # sub-128 K/N matmuls off the serial MXU push/pop path.
        w = w_ref[...]
        acc = h[:, 0:1] * w[0:1, :]
        for k in range(1, w.shape[0]):
            acc = acc + h[:, k:k + 1] * w[k:k + 1, :]
        if b_ref is not None:
            acc = acc + b_ref[...]
        return jnp.maximum(acc, 0.0) if relu else acc

    # Layer 0 (4 -> 256) on the VPU: a K=4 MXU pass costs as much as a full
    # 256x256 pass but carries ~0.5% of the FLOPs.
    h = dense_vpu(x, w0, b0)       # (TM, 256)
    h = dense_mxu(h, w1, b1)       # (TM, 256)
    h = dense_mxu(h, w2, b2)       # (TM, 256)
    h = dense_mxu(h, w3, b3)       # (TM, 256)
    h = dense_mxu(h, w4, b4)       # (TM, 16)
    h = dense_vpu(h, w5, b5)       # (TM, 8)
    h = dense_vpu(h, w6, b6)       # (TM, 8)

    # Folded heads: out = h @ W_eff + b_eff + x[:, 2:4] @ C.T
    out = dense_vpu(h, wh, bh, relu=False)           # (TM, 2)
    xhw = xh[...]                                    # (2, 2) == C.T
    out = out + x[:, 2:3] * xhw[0:1, :] + x[:, 3:4] * xhw[1:2, :]
    out_ref[...] = out.astype(out_ref.dtype)


def init_params(key):
    """PyTorch-layout parameters: weights (out, in), biases (out,)."""
    ws, bs = [], []
    for (fan_in, fan_out) in LAYER_DIMS:
        key, kw, kb = jax.random.split(key, 3)
        bound = 1.0 / jnp.sqrt(fan_in)
        ws.append(jax.random.uniform(kw, (fan_out, fan_in), jnp.float32, -bound, bound))
        bs.append(jax.random.uniform(kb, (fan_out,), jnp.float32, -bound, bound))
    key, k1, k2, k3 = jax.random.split(key, 4)
    wc = jax.random.uniform(k1, (1, 2), jnp.float32, -1.0, 1.0)     # controller
    wl = jax.random.uniform(k2, (1, 2), jnp.float32, -1.0, 1.0)     # linear_weight
    wcon = jax.random.uniform(k3, (2, 2), jnp.float32, -1.0, 1.0)   # linear_constraint
    return ws, bs, wc, wl, wcon


def prep_params(params, mxu_dtype=jnp.bfloat16):
    """One-time conversion of PyTorch-layout params into kernel operands.

    Folds controller / linear_weight / linear_constraint into the last layer:
      out = (h @ W7.T + b7) @ wc.T @ wcon[:, :1].T + x[:, 2:4] @ wl.T @ wcon[:, 1:].T
          = h @ (A @ W7).T + (A @ b7) + x[:, 2:4] @ C.T
      with A = wcon[:, :1] @ wc and C = wcon[:, 1:] @ wl (both 2x2).

    Layers 1..4 (the MXU layers) are stored in `mxu_dtype` (bf16 by default for
    native MXU rate; pass jnp.float32 to preserve the exact 1e-4 reference match).
    Layer 0 (VPU) and the tiny tail/head layers stay f32.
    """
    ws, bs, wc, wl, wcon = params
    A = wcon[:, 0:1] @ wc                      # (2, 2)
    C = wcon[:, 1:2] @ wl                      # (2, 2)
    w_head = (A @ ws[7]).T                     # (8, 2)  effective (in, out)
    b_head = (A @ bs[7]).reshape(1, 2)         # (1, 2)
    x_head = C.T                               # (2, 2)  applied to x[:, 2:4]
    ops = []
    for i in range(7):                         # layers 0..6: (in, out) weights, (1, out) bias
        w = ws[i].T
        if 1 <= i <= 4:                        # MXU layers -> optional bf16
            w = w.astype(mxu_dtype)
        ops += [w, bs[i].reshape(1, -1)]
    ops += [w_head, b_head, x_head]
    return tuple(ops)


def _round_up(n, m):
    return ((n + m - 1) // m) * m


def _choose_tile(B, tm_max=2048, min_dual_core_batch=1024):
    """Padding-aware batch tiling.

    n_steps = cdiv(B, tm_max); TM = round_up(cdiv(B, n_steps), 8).  When the
    batch is large enough, keep the step count even so a 2-TensorCore chip
    (v7x) can shard the "parallel" batch axis over both cores; this is a no-op
    cost on single-TC v5e/v6e.
    """
    n_steps = pl.cdiv(B, tm_max)
    if n_steps % 2 == 1 and B >= min_dual_core_batch:
        n_steps += 1
    tm = _round_up(pl.cdiv(B, n_steps), 8)
    return tm, n_steps


def onnxnet_forward(x, prepped, *, tm_max=2048):
    B = x.shape[0]
    TM, n_steps = _choose_tile(B, tm_max)
    Bp = TM * n_steps
    xp = jnp.pad(x, ((0, Bp - B), (0, 0))) if Bp != B else x

    def _const(i):
        return (0, 0)

    in_specs = [pl.BlockSpec((TM, 4), lambda i: (i, 0))]
    # Constant index maps: weights/biases are DMA'd once and stay VMEM-resident.
    in_specs += [pl.BlockSpec(a.shape, _const) for a in prepped]

    compiler_kwargs = dict(dimension_semantics=("parallel",))
    if TM > 4096:
        # Only needed if the tile is pushed well past the default tm_max; keeps
        # v5e's 16 MiB scoped-VMEM default from binding on huge tiles.
        compiler_kwargs["vmem_limit_bytes"] = 64 * 1024 * 1024

    out = pl.pallas_call(
        onnxnet_kernel,
        out_shape=jax.ShapeDtypeStruct((Bp, 2), jnp.float32),
        grid=(n_steps,),
        in_specs=in_specs,
        out_specs=pl.BlockSpec((TM, 2), lambda i: (i, 0)),
        compiler_params=pltpu.CompilerParams(**compiler_kwargs),
    )(xp, *prepped)
    return out[:B]


def onnxnet_reference(x, params):
    ws, bs, wc, wl, wcon = params
    h = x
    for i, (w, b) in enumerate(zip(ws, bs)):
        h = h @ w.T + b
        if i < len(ws) - 1:
            h = jnp.maximum(h, 0.0)
    out1 = h @ wc.T
    out2 = x[:, 2:] @ wl.T
    cat = jnp.concatenate([out1, out2], axis=1)
    return cat @ wcon.T


if __name__ == "__main__":
    key = jax.random.PRNGKey(0)
    key, kx = jax.random.split(key)
    B = 2
    x = jax.random.normal(kx, (B, 4), jnp.float32)

    params = init_params(key)
    # f32 MXU operands: bit-comparable to the f32 reference at the 1e-4 spec.
    prepped_f32 = prep_params(params, mxu_dtype=jnp.float32)
    # bf16 MXU operands: native-rate MXU path (deliberately relaxed tolerance).
    prepped_bf16 = prep_params(params, mxu_dtype=jnp.bfloat16)

    ref = onnxnet_reference(x, params)
    out = jax.block_until_ready(onnxnet_forward(x, prepped_f32))
    assert out.shape == (B, 2), out.shape
    assert jnp.allclose(out, ref, atol=1e-4, rtol=1e-4), (out, ref)

    out_bf16 = jax.block_until_ready(onnxnet_forward(x, prepped_bf16))
    assert jnp.allclose(out_bf16, ref, atol=5e-2, rtol=5e-2), (out_bf16, ref)

    # Larger, non-multiple-of-8 batch exercises the grid / padding path
    # (B=300 now pads to 304 rows instead of 512).
    key, kx2 = jax.random.split(key)
    x2 = jax.random.normal(kx2, (300, 4), jnp.float32)
    ref2 = onnxnet_reference(x2, params)

    out2 = jax.block_until_ready(onnxnet_forward(x2, prepped_f32))
    assert out2.shape == (300, 2), out2.shape
    assert jnp.allclose(out2, ref2, atol=1e-4, rtol=1e-4)

    out2_bf16 = jax.block_until_ready(onnxnet_forward(x2, prepped_bf16))
    assert jnp.allclose(out2_bf16, ref2, atol=5e-2, rtol=5e-2)

    print("KERNEL_OK")
</pallas_src>

<mosaic_0001>
module attributes {stable_mosaic.version = 11 : i64} {
  func.func @onnxnet_kernel(%arg0: i32, %arg1: memref<8x4xf32, #tpu.memory_space<vmem>>, %arg2: memref<4x256xf32, #tpu.memory_space<vmem>>, %arg3: memref<1x256xf32, #tpu.memory_space<vmem>>, %arg4: memref<256x256xf32, #tpu.memory_space<vmem>>, %arg5: memref<1x256xf32, #tpu.memory_space<vmem>>, %arg6: memref<256x256xf32, #tpu.memory_space<vmem>>, %arg7: memref<1x256xf32, #tpu.memory_space<vmem>>, %arg8: memref<256x256xf32, #tpu.memory_space<vmem>>, %arg9: memref<1x256xf32, #tpu.memory_space<vmem>>, %arg10: memref<256x16xf32, #tpu.memory_space<vmem>>, %arg11: memref<1x16xf32, #tpu.memory_space<vmem>>, %arg12: memref<16x8xf32, #tpu.memory_space<vmem>>, %arg13: memref<1x8xf32, #tpu.memory_space<vmem>>, %arg14: memref<8x8xf32, #tpu.memory_space<vmem>>, %arg15: memref<1x8xf32, #tpu.memory_space<vmem>>, %arg16: memref<8x2xf32, #tpu.memory_space<vmem>>, %arg17: memref<1x2xf32, #tpu.memory_space<vmem>>, %arg18: memref<2x2xf32, #tpu.memory_space<vmem>>, %arg19: memref<8x2xf32, #tpu.memory_space<vmem>>) attributes {dimension_semantics = [#tpu.dimension_semantics<parallel>], iteration_bounds = array<i64: 1>, scalar_prefetch = 0 : i64, scratch_operands = 0 : i64, tpu.core_type = #tpu.core_type<tc>, window_params = [{transform_indices = @transform_0, window_bounds = array<i64: 8, 4>}, {pipeline_mode = #tpu.pipeline_mode<synchronous>, transform_indices = @transform_1, window_bounds = array<i64: 4, 256>}, {pipeline_mode = #tpu.pipeline_mode<synchronous>, transform_indices = @transform_2, window_bounds = array<i64: 1, 256>}, {pipeline_mode = #tpu.pipeline_mode<synchronous>, transform_indices = @transform_3, window_bounds = array<i64: 256, 256>}, {pipeline_mode = #tpu.pipeline_mode<synchronous>, transform_indices = @transform_4, window_bounds = array<i64: 1, 256>}, {pipeline_mode = #tpu.pipeline_mode<synchronous>, transform_indices = @transform_5, window_bounds = array<i64: 256, 256>}, {pipeline_mode = #tpu.pipeline_mode<synchronous>, transform_indices = @transform_6, window_bounds = array<i64: 1, 256>}, {pipeline_mode = #tpu.pipeline_mode<synchronous>, transform_indices = @transform_7, window_bounds = array<i64: 256, 256>}, {pipeline_mode = #tpu.pipeline_mode<synchronous>, transform_indices = @transform_8, window_bounds = array<i64: 1, 256>}, {pipeline_mode = #tpu.pipeline_mode<synchronous>, transform_indices = @transform_9, window_bounds = array<i64: 256, 16>}, {pipeline_mode = #tpu.pipeline_mode<synchronous>, transform_indices = @transform_10, window_bounds = array<i64: 1, 16>}, {pipeline_mode = #tpu.pipeline_mode<synchronous>, transform_indices = @transform_11, window_bounds = array<i64: 16, 8>}, {pipeline_mode = #tpu.pipeline_mode<synchronous>, transform_indices = @transform_12, window_bounds = array<i64: 1, 8>}, {pipeline_mode = #tpu.pipeline_mode<synchronous>, transform_indices = @transform_13, window_bounds = array<i64: 8, 8>}, {pipeline_mode = #tpu.pipeline_mode<synchronous>, transform_indices = @transform_14, window_bounds = array<i64: 1, 8>}, {pipeline_mode = #tpu.pipeline_mode<synchronous>, transform_indices = @transform_15, window_bounds = array<i64: 8, 2>}, {pipeline_mode = #tpu.pipeline_mode<synchronous>, transform_indices = @transform_16, window_bounds = array<i64: 1, 2>}, {pipeline_mode = #tpu.pipeline_mode<synchronous>, transform_indices = @transform_17, window_bounds = array<i64: 2, 2>}, {transform_indices = @transform_18, window_bounds = array<i64: 8, 2>}]} {
    %c0 = arith.constant 0 : index
    %c0_0 = arith.constant 0 : index
    %0 = vector.load %arg1[%c0, %c0_0] : memref<8x4xf32, #tpu.memory_space<vmem>>, vector<8x4xf32>
    %c0_1 = arith.constant 0 : index
    %c0_2 = arith.constant 0 : index
    %1 = vector.load %arg2[%c0_1, %c0_2] : memref<4x256xf32, #tpu.memory_space<vmem>>, vector<4x256xf32>
    %2 = vector.extract_strided_slice %0 {offsets = [0, 0], sizes = [8, 1], strides = [1, 1]} : vector<8x4xf32> to vector<8x1xf32>
    %3 = vector.extract_strided_slice %1 {offsets = [0, 0], sizes = [1, 256], strides = [1, 1]} : vector<4x256xf32> to vector<1x256xf32>
    %4 = vector.broadcast %2 : vector<8x1xf32> to vector<8x256xf32>
    %5 = vector.broadcast %3 : vector<1x256xf32> to vector<8x256xf32>
    %6 = arith.mulf %4, %5 : vector<8x256xf32>
    %7 = vector.extract_strided_slice %0 {offsets = [0, 1], sizes = [8, 1], strides = [1, 1]} : vector<8x4xf32> to vector<8x1xf32>
    %8 = vector.extract_strided_slice %1 {offsets = [1, 0], sizes = [1, 256], strides = [1, 1]} : vector<4x256xf32> to vector<1x256xf32>
    %9 = vector.broadcast %7 : vector<8x1xf32> to vector<8x256xf32>
    %10 = vector.broadcast %8 : vector<1x256xf32> to vector<8x256xf32>
    %11 = arith.mulf %9, %10 : vector<8x256xf32>
    %12 = arith.addf %6, %11 : vector<8x256xf32>
    %13 = vector.extract_strided_slice %0 {offsets = [0, 2], sizes = [8, 1], strides = [1, 1]} : vector<8x4xf32> to vector<8x1xf32>
    %14 = vector.extract_strided_slice %1 {offsets = [2, 0], sizes = [1, 256], strides = [1, 1]} : vector<4x256xf32> to vector<1x256xf32>
    %15 = vector.broadcast %13 : vector<8x1xf32> to vector<8x256xf32>
    %16 = vector.broadcast %14 : vector<1x256xf32> to vector<8x256xf32>
    %17 = arith.mulf %15, %16 : vector<8x256xf32>
    %18 = arith.addf %12, %17 : vector<8x256xf32>
    %19 = vector.extract_strided_slice %0 {offsets = [0, 3], sizes = [8, 1], strides = [1, 1]} : vector<8x4xf32> to vector<8x1xf32>
    %20 = vector.extract_strided_slice %1 {offsets = [3, 0], sizes = [1, 256], strides = [1, 1]} : vector<4x256xf32> to vector<1x256xf32>
    %21 = vector.broadcast %19 : vector<8x1xf32> to vector<8x256xf32>
    %22 = vector.broadcast %20 : vector<1x256xf32> to vector<8x256xf32>
    %23 = arith.mulf %21, %22 : vector<8x256xf32>
    %24 = arith.addf %18, %23 : vector<8x256xf32>
    %c0_3 = arith.constant 0 : index
    %c0_4 = arith.constant 0 : index
    %25 = vector.load %arg3[%c0_3, %c0_4] : memref<1x256xf32, #tpu.memory_space<vmem>>, vector<1x256xf32>
    %26 = vector.broadcast %25 : vector<1x256xf32> to vector<8x256xf32>
    %27 = arith.addf %24, %26 : vector<8x256xf32>
    %cst = arith.constant 0.000000e+00 : f32
    %28 = vector.broadcast %cst : f32 to vector<8x256xf32>
    %29 = arith.maximumf %27, %28 : vector<8x256xf32>
    %c0_5 = arith.constant 0 : index
    %c0_6 = arith.constant 0 : index
    %30 = vector.load %arg4[%c0_5, %c0_6] : memref<256x256xf32, #tpu.memory_space<vmem>>, vector<256x256xf32>
    %cst_7 = arith.constant dense<0.000000e+00> : vector<8x256xf32>
    %31 = tpu.matmul %29, %30, %cst_7 {dimension_numbers = #tpu.dot_dimension_numbers<[1], [0], [0], [1], [0, 0, 1, 1], [], []>} : vector<8x256xf32>, vector<256x256xf32>, vector<8x256xf32> -> vector<8x256xf32>
    %c0_8 = arith.constant 0 : index
    %c0_9 = arith.constant 0 : index
    %32 = vector.load %arg5[%c0_8, %c0_9] : memref<1x256xf32, #tpu.memory_space<vmem>>, vector<1x256xf32>
    %33 = vector.broadcast %32 : vector<1x256xf32> to vector<8x256xf32>
    %34 = arith.addf %31, %33 : vector<8x256xf32>
    %cst_10 = arith.constant 0.000000e+00 : f32
    %35 = vector.broadcast %cst_10 : f32 to vector<8x256xf32>
    %36 = arith.maximumf %34, %35 : vector<8x256xf32>
    %c0_11 = arith.constant 0 : index
    %c0_12 = arith.constant 0 : index
    %37 = vector.load %arg6[%c0_11, %c0_12] : memref<256x256xf32, #tpu.memory_space<vmem>>, vector<256x256xf32>
    %cst_13 = arith.constant dense<0.000000e+00> : vector<8x256xf32>
    %38 = tpu.matmul %36, %37, %cst_13 {dimension_numbers = #tpu.dot_dimension_numbers<[1], [0], [0], [1], [0, 0, 1, 1], [], []>} : vector<8x256xf32>, vector<256x256xf32>, vector<8x256xf32> -> vector<8x256xf32>
    %c0_14 = arith.constant 0 : index
    %c0_15 = arith.constant 0 : index
    %39 = vector.load %arg7[%c0_14, %c0_15] : memref<1x256xf32, #tpu.memory_space<vmem>>, vector<1x256xf32>
    %40 = vector.broadcast %39 : vector<1x256xf32> to vector<8x256xf32>
    %41 = arith.addf %38, %40 : vector<8x256xf32>
    %cst_16 = arith.constant 0.000000e+00 : f32
    %42 = vector.broadcast %cst_16 : f32 to vector<8x256xf32>
    %43 = arith.maximumf %41, %42 : vector<8x256xf32>
    %c0_17 = arith.constant 0 : index
    %c0_18 = arith.constant 0 : index
    %44 = vector.load %arg8[%c0_17, %c0_18] : memref<256x256xf32, #tpu.memory_space<vmem>>, vector<256x256xf32>
    %cst_19 = arith.constant dense<0.000000e+00> : vector<8x256xf32>
    %45 = tpu.matmul %43, %44, %cst_19 {dimension_numbers = #tpu.dot_dimension_numbers<[1], [0], [0], [1], [0, 0, 1, 1], [], []>} : vector<8x256xf32>, vector<256x256xf32>, vector<8x256xf32> -> vector<8x256xf32>
    %c0_20 = arith.constant 0 : index
    %c0_21 = arith.constant 0 : index
    %46 = vector.load %arg9[%c0_20, %c0_21] : memref<1x256xf32, #tpu.memory_space<vmem>>, vector<1x256xf32>
    %47 = vector.broadcast %46 : vector<1x256xf32> to vector<8x256xf32>
    %48 = arith.addf %45, %47 : vector<8x256xf32>
    %cst_22 = arith.constant 0.000000e+00 : f32
    %49 = vector.broadcast %cst_22 : f32 to vector<8x256xf32>
    %50 = arith.maximumf %48, %49 : vector<8x256xf32>
    %c0_23 = arith.constant 0 : index
    %c0_24 = arith.constant 0 : index
    %51 = vector.load %arg10[%c0_23, %c0_24] : memref<256x16xf32, #tpu.memory_space<vmem>>, vector<256x16xf32>
    %cst_25 = arith.constant dense<0.000000e+00> : vector<8x16xf32>
    %52 = tpu.matmul %50, %51, %cst_25 {dimension_numbers = #tpu.dot_dimension_numbers<[1], [0], [0], [1], [0, 0, 1, 1], [], []>} : vector<8x256xf32>, vector<256x16xf32>, vector<8x16xf32> -> vector<8x16xf32>
    %c0_26 = arith.constant 0 : index
    %c0_27 = arith.constant 0 : index
    %53 = vector.load %arg11[%c0_26, %c0_27] : memref<1x16xf32, #tpu.memory_space<vmem>>, vector<1x16xf32>
    %54 = vector.broadcast %53 : vector<1x16xf32> to vector<8x16xf32>
    %55 = arith.addf %52, %54 : vector<8x16xf32>
    %cst_28 = arith.constant 0.000000e+00 : f32
    %56 = vector.broadcast %cst_28 : f32 to vector<8x16xf32>
    %57 = arith.maximumf %55, %56 : vector<8x16xf32>
    %c0_29 = arith.constant 0 : index
    %c0_30 = arith.constant 0 : index
    %58 = vector.load %arg12[%c0_29, %c0_30] : memref<16x8xf32, #tpu.memory_space<vmem>>, vector<16x8xf32>
    %59 = vector.extract_strided_slice %57 {offsets = [0, 0], sizes = [8, 1], strides = [1, 1]} : vector<8x16xf32> to vector<8x1xf32>
    %60 = vector.extract_strided_slice %58 {offsets = [0, 0], sizes = [1, 8], strides = [1, 1]} : vector<16x8xf32> to vector<1x8xf32>
    %61 = vector.broadcast %59 : vector<8x1xf32> to vector<8x8xf32>
    %62 = vector.broadcast %60 : vector<1x8xf32> to vector<8x8xf32>
    %63 = arith.mulf %61, %62 : vector<8x8xf32>
    %64 = vector.extract_strided_slice %57 {offsets = [0, 1], sizes = [8, 1], strides = [1, 1]} : vector<8x16xf32> to vector<8x1xf32>
    %65 = vector.extract_strided_slice %58 {offsets = [1, 0], sizes = [1, 8], strides = [1, 1]} : vector<16x8xf32> to vector<1x8xf32>
    %66 = vector.broadcast %64 : vector<8x1xf32> to vector<8x8xf32>
    %67 = vector.broadcast %65 : vector<1x8xf32> to vector<8x8xf32>
    %68 = arith.mulf %66, %67 : vector<8x8xf32>
    %69 = arith.addf %63, %68 : vector<8x8xf32>
    %70 = vector.extract_strided_slice %57 {offsets = [0, 2], sizes = [8, 1], strides = [1, 1]} : vector<8x16xf32> to vector<8x1xf32>
    %71 = vector.extract_strided_slice %58 {offsets = [2, 0], sizes = [1, 8], strides = [1, 1]} : vector<16x8xf32> to vector<1x8xf32>
    %72 = vector.broadcast %70 : vector<8x1xf32> to vector<8x8xf32>
    %73 = vector.broadcast %71 : vector<1x8xf32> to vector<8x8xf32>
    %74 = arith.mulf %72, %73 : vector<8x8xf32>
    %75 = arith.addf %69, %74 : vector<8x8xf32>
    %76 = vector.extract_strided_slice %57 {offsets = [0, 3], sizes = [8, 1], strides = [1, 1]} : vector<8x16xf32> to vector<8x1xf32>
    %77 = vector.extract_strided_slice %58 {offsets = [3, 0], sizes = [1, 8], strides = [1, 1]} : vector<16x8xf32> to vector<1x8xf32>
    %78 = vector.broadcast %76 : vector<8x1xf32> to vector<8x8xf32>
    %79 = vector.broadcast %77 : vector<1x8xf32> to vector<8x8xf32>
    %80 = arith.mulf %78, %79 : vector<8x8xf32>
    %81 = arith.addf %75, %80 : vector<8x8xf32>
    %82 = vector.extract_strided_slice %57 {offsets = [0, 4], sizes = [8, 1], strides = [1, 1]} : vector<8x16xf32> to vector<8x1xf32>
    %83 = vector.extract_strided_slice %58 {offsets = [4, 0], sizes = [1, 8], strides = [1, 1]} : vector<16x8xf32> to vector<1x8xf32>
    %84 = vector.broadcast %82 : vector<8x1xf32> to vector<8x8xf32>
    %85 = vector.broadcast %83 : vector<1x8xf32> to vector<8x8xf32>
    %86 = arith.mulf %84, %85 : vector<8x8xf32>
    %87 = arith.addf %81, %86 : vector<8x8xf32>
    %88 = vector.extract_strided_slice %57 {offsets = [0, 5], sizes = [8, 1], strides = [1, 1]} : vector<8x16xf32> to vector<8x1xf32>
    %89 = vector.extract_strided_slice %58 {offsets = [5, 0], sizes = [1, 8], strides = [1, 1]} : vector<16x8xf32> to vector<1x8xf32>
    %90 = vector.broadcast %88 : vector<8x1xf32> to vector<8x8xf32>
    %91 = vector.broadcast %89 : vector<1x8xf32> to vector<8x8xf32>
    %92 = arith.mulf %90, %91 : vector<8x8xf32>
    %93 = arith.addf %87, %92 : vector<8x8xf32>
    %94 = vector.extract_strided_slice %57 {offsets = [0, 6], sizes = [8, 1], strides = [1, 1]} : vector<8x16xf32> to vector<8x1xf32>
    %95 = vector.extract_strided_slice %58 {offsets = [6, 0], sizes = [1, 8], strides = [1, 1]} : vector<16x8xf32> to vector<1x8xf32>
    %96 = vector.broadcast %94 : vector<8x1xf32> to vector<8x8xf32>
    %97 = vector.broadcast %95 : vector<1x8xf32> to vector<8x8xf32>
    %98 = arith.mulf %96, %97 : vector<8x8xf32>
    %99 = arith.addf %93, %98 : vector<8x8xf32>
    %100 = vector.extract_strided_slice %57 {offsets = [0, 7], sizes = [8, 1], strides = [1, 1]} : vector<8x16xf32> to vector<8x1xf32>
    %101 = vector.extract_strided_slice %58 {offsets = [7, 0], sizes = [1, 8], strides = [1, 1]} : vector<16x8xf32> to vector<1x8xf32>
    %102 = vector.broadcast %100 : vector<8x1xf32> to vector<8x8xf32>
    %103 = vector.broadcast %101 : vector<1x8xf32> to vector<8x8xf32>
    %104 = arith.mulf %102, %103 : vector<8x8xf32>
    %105 = arith.addf %99, %104 : vector<8x8xf32>
    %106 = vector.extract_strided_slice %57 {offsets = [0, 8], sizes = [8, 1], strides = [1, 1]} : vector<8x16xf32> to vector<8x1xf32>
    %107 = vector.extract_strided_slice %58 {offsets = [8, 0], sizes = [1, 8], strides = [1, 1]} : vector<16x8xf32> to vector<1x8xf32>
    %108 = vector.broadcast %106 : vector<8x1xf32> to vector<8x8xf32>
    %109 = vector.broadcast %107 : vector<1x8xf32> to vector<8x8xf32>
    %110 = arith.mulf %108, %109 : vector<8x8xf32>
    %111 = arith.addf %105, %110 : vector<8x8xf32>
    %112 = vector.extract_strided_slice %57 {offsets = [0, 9], sizes = [8, 1], strides = [1, 1]} : vector<8x16xf32> to vector<8x1xf32>
    %113 = vector.extract_strided_slice %58 {offsets = [9, 0], sizes = [1, 8], strides = [1, 1]} : vector<16x8xf32> to vector<1x8xf32>
    %114 = vector.broadcast %112 : vector<8x1xf32> to vector<8x8xf32>
    %115 = vector.broadcast %113 : vector<1x8xf32> to vector<8x8xf32>
    %116 = arith.mulf %114, %115 : vector<8x8xf32>
    %117 = arith.addf %111, %116 : vector<8x8xf32>
    %118 = vector.extract_strided_slice %57 {offsets = [0, 10], sizes = [8, 1], strides = [1, 1]} : vector<8x16xf32> to vector<8x1xf32>
    %119 = vector.extract_strided_slice %58 {offsets = [10, 0], sizes = [1, 8], strides = [1, 1]} : vector<16x8xf32> to vector<1x8xf32>
    %120 = vector.broadcast %118 : vector<8x1xf32> to vector<8x8xf32>
    %121 = vector.broadcast %119 : vector<1x8xf32> to vector<8x8xf32>
    %122 = arith.mulf %120, %121 : vector<8x8xf32>
    %123 = arith.addf %117, %122 : vector<8x8xf32>
    %124 = vector.extract_strided_slice %57 {offsets = [0, 11], sizes = [8, 1], strides = [1, 1]} : vector<8x16xf32> to vector<8x1xf32>
    %125 = vector.extract_strided_slice %58 {offsets = [11, 0], sizes = [1, 8], strides = [1, 1]} : vector<16x8xf32> to vector<1x8xf32>
    %126 = vector.broadcast %124 : vector<8x1xf32> to vector<8x8xf32>
    %127 = vector.broadcast %125 : vector<1x8xf32> to vector<8x8xf32>
    %128 = arith.mulf %126, %127 : vector<8x8xf32>
    %129 = arith.addf %123, %128 : vector<8x8xf32>
    %130 = vector.extract_strided_slice %57 {offsets = [0, 12], sizes = [8, 1], strides = [1, 1]} : vector<8x16xf32> to vector<8x1xf32>
    %131 = vector.extract_strided_slice %58 {offsets = [12, 0], sizes = [1, 8], strides = [1, 1]} : vector<16x8xf32> to vector<1x8xf32>
    %132 = vector.broadcast %130 : vector<8x1xf32> to vector<8x8xf32>
    %133 = vector.broadcast %131 : vector<1x8xf32> to vector<8x8xf32>
    %134 = arith.mulf %132, %133 : vector<8x8xf32>
    %135 = arith.addf %129, %134 : vector<8x8xf32>
    %136 = vector.extract_strided_slice %57 {offsets = [0, 13], sizes = [8, 1], strides = [1, 1]} : vector<8x16xf32> to vector<8x1xf32>
    %137 = vector.extract_strided_slice %58 {offsets = [13, 0], sizes = [1, 8], strides = [1, 1]} : vector<16x8xf32> to vector<1x8xf32>
    %138 = vector.broadcast %136 : vector<8x1xf32> to vector<8x8xf32>
    %139 = vector.broadcast %137 : vector<1x8xf32> to vector<8x8xf32>
    %140 = arith.mulf %138, %139 : vector<8x8xf32>
    %141 = arith.addf %135, %140 : vector<8x8xf32>
    %142 = vector.extract_strided_slice %57 {offsets = [0, 14], sizes = [8, 1], strides = [1, 1]} : vector<8x16xf32> to vector<8x1xf32>
    %143 = vector.extract_strided_slice %58 {offsets = [14, 0], sizes = [1, 8], strides = [1, 1]} : vector<16x8xf32> to vector<1x8xf32>
    %144 = vector.broadcast %142 : vector<8x1xf32> to vector<8x8xf32>
    %145 = vector.broadcast %143 : vector<1x8xf32> to vector<8x8xf32>
    %146 = arith.mulf %144, %145 : vector<8x8xf32>
    %147 = arith.addf %141, %146 : vector<8x8xf32>
    %148 = vector.extract_strided_slice %57 {offsets = [0, 15], sizes = [8, 1], strides = [1, 1]} : vector<8x16xf32> to vector<8x1xf32>
    %149 = vector.extract_strided_slice %58 {offsets = [15, 0], sizes = [1, 8], strides = [1, 1]} : vector<16x8xf32> to vector<1x8xf32>
    %150 = vector.broadcast %148 : vector<8x1xf32> to vector<8x8xf32>
    %151 = vector.broadcast %149 : vector<1x8xf32> to vector<8x8xf32>
    %152 = arith.mulf %150, %151 : vector<8x8xf32>
    %153 = arith.addf %147, %152 : vector<8x8xf32>
    %c0_31 = arith.constant 0 : index
    %c0_32 = arith.constant 0 : index
    %154 = vector.load %arg13[%c0_31, %c0_32] : memref<1x8xf32, #tpu.memory_space<vmem>>, vector<1x8xf32>
    %155 = vector.broadcast %154 : vector<1x8xf32> to vector<8x8xf32>
    %156 = arith.addf %153, %155 : vector<8x8xf32>
    %cst_33 = arith.constant 0.000000e+00 : f32
    %157 = vector.broadcast %cst_33 : f32 to vector<8x8xf32>
    %158 = arith.maximumf %156, %157 : vector<8x8xf32>
    %c0_34 = arith.constant 0 : index
    %c0_35 = arith.constant 0 : index
    %159 = vector.load %arg14[%c0_34, %c0_35] : memref<8x8xf32, #tpu.memory_space<vmem>>, vector<8x8xf32>
    %160 = vector.extract_strided_slice %158 {offsets = [0, 0], sizes = [8, 1], strides = [1, 1]} : vector<8x8xf32> to vector<8x1xf32>
    %161 = vector.extract_strided_slice %159 {offsets = [0, 0], sizes = [1, 8], strides = [1, 1]} : vector<8x8xf32> to vector<1x8xf32>
    %162 = vector.broadcast %160 : vector<8x1xf32> to vector<8x8xf32>
    %163 = vector.broadcast %161 : vector<1x8xf32> to vector<8x8xf32>
    %164 = arith.mulf %162, %163 : vector<8x8xf32>
    %165 = vector.extract_strided_slice %158 {offsets = [0, 1], sizes = [8, 1], strides = [1, 1]} : vector<8x8xf32> to vector<8x1xf32>
    %166 = vector.extract_strided_slice %159 {offsets = [1, 0], sizes = [1, 8], strides = [1, 1]} : vector<8x8xf32> to vector<1x8xf32>
    %167 = vector.broadcast %165 : vector<8x1xf32> to vector<8x8xf32>
    %168 = vector.broadcast %166 : vector<1x8xf32> to vector<8x8xf32>
    %169 = arith.mulf %167, %168 : vector<8x8xf32>
    %170 = arith.addf %164, %169 : vector<8x8xf32>
    %171 = vector.extract_strided_slice %158 {offsets = [0, 2], sizes = [8, 1], strides = [1, 1]} : vector<8x8xf32> to vector<8x1xf32>
    %172 = vector.extract_strided_slice %159 {offsets = [2, 0], sizes = [1, 8], strides = [1, 1]} : vector<8x8xf32> to vector<1x8xf32>
    %173 = vector.broadcast %171 : vector<8x1xf32> to vector<8x8xf32>
    %174 = vector.broadcast %172 : vector<1x8xf32> to vector<8x8xf32>
    %175 = arith.mulf %173, %174 : vector<8x8xf32>
    %176 = arith.addf %170, %175 : vector<8x8xf32>
    %177 = vector.extract_strided_slice %158 {offsets = [0, 3], sizes = [8, 1], strides = [1, 1]} : vector<8x8xf32> to vector<8x1xf32>
    %178 = vector.extract_strided_slice %159 {offsets = [3, 0], sizes = [1, 8], strides = [1, 1]} : vector<8x8xf32> to vector<1x8xf32>
    %179 = vector.broadcast %177 : vector<8x1xf32> to vector<8x8xf32>
    %180 = vector.broadcast %178 : vector<1x8xf32> to vector<8x8xf32>
    %181 = arith.mulf %179, %180 : vector<8x8xf32>
    %182 = arith.addf %176, %181 : vector<8x8xf32>
    %183 = vector.extract_strided_slice %158 {offsets = [0, 4], sizes = [8, 1], strides = [1, 1]} : vector<8x8xf32> to vector<8x1xf32>
    %184 = vector.extract_strided_slice %159 {offsets = [4, 0], sizes = [1, 8], strides = [1, 1]} : vector<8x8xf32> to vector<1x8xf32>
    %185 = vector.broadcast %183 : vector<8x1xf32> to vector<8x8xf32>
    %186 = vector.broadcast %184 : vector<1x8xf32> to vector<8x8xf32>
    %187 = arith.mulf %185, %186 : vector<8x8xf32>
    %188 = arith.addf %182, %187 : vector<8x8xf32>
    %189 = vector.extract_strided_slice %158 {offsets = [0, 5], sizes = [8, 1], strides = [1, 1]} : vector<8x8xf32> to vector<8x1xf32>
    %190 = vector.extract_strided_slice %159 {offsets = [5, 0], sizes = [1, 8], strides = [1, 1]} : vector<8x8xf32> to vector<1x8xf32>
    %191 = vector.broadcast %189 : vector<8x1xf32> to vector<8x8xf32>
    %192 = vector.broadcast %190 : vector<1x8xf32> to vector<8x8xf32>
    %193 = arith.mulf %191, %192 : vector<8x8xf32>
    %194 = arith.addf %188, %193 : vector<8x8xf32>
    %195 = vector.extract_strided_slice %158 {offsets = [0, 6], sizes = [8, 1], strides = [1, 1]} : vector<8x8xf32> to vector<8x1xf32>
    %196 = vector.extract_strided_slice %159 {offsets = [6, 0], sizes = [1, 8], strides = [1, 1]} : vector<8x8xf32> to vector<1x8xf32>
    %197 = vector.broadcast %195 : vector<8x1xf32> to vector<8x8xf32>
    %198 = vector.broadcast %196 : vector<1x8xf32> to vector<8x8xf32>
    %199 = arith.mulf %197, %198 : vector<8x8xf32>
    %200 = arith.addf %194, %199 : vector<8x8xf32>
    %201 = vector.extract_strided_slice %158 {offsets = [0, 7], sizes = [8, 1], strides = [1, 1]} : vector<8x8xf32> to vector<8x1xf32>
    %202 = vector.extract_strided_slice %159 {offsets = [7, 0], sizes = [1, 8], strides = [1, 1]} : vector<8x8xf32> to vector<1x8xf32>
    %203 = vector.broadcast %201 : vector<8x1xf32> to vector<8x8xf32>
    %204 = vector.broadcast %202 : vector<1x8xf32> to vector<8x8xf32>
    %205 = arith.mulf %203, %204 : vector<8x8xf32>
    %206 = arith.addf %200, %205 : vector<8x8xf32>
    %c0_36 = arith.constant 0 : index
    %c0_37 = arith.constant 0 : index
    %207 = vector.load %arg15[%c0_36, %c0_37] : memref<1x8xf32, #tpu.memory_space<vmem>>, vector<1x8xf32>
    %208 = vector.broadcast %207 : vector<1x8xf32> to vector<8x8xf32>
    %209 = arith.addf %206, %208 : vector<8x8xf32>
    %cst_38 = arith.constant 0.000000e+00 : f32
    %210 = vector.broadcast %cst_38 : f32 to vector<8x8xf32>
    %211 = arith.maximumf %209, %210 : vector<8x8xf32>
    %c0_39 = arith.constant 0 : index
    %c0_40 = arith.constant 0 : index
    %212 = vector.load %arg16[%c0_39, %c0_40] : memref<8x2xf32, #tpu.memory_space<vmem>>, vector<8x2xf32>
    %213 = vector.extract_strided_slice %211 {offsets = [0, 0], sizes = [8, 1], strides = [1, 1]} : vector<8x8xf32> to vector<8x1xf32>
    %214 = vector.extract_strided_slice %212 {offsets = [0, 0], sizes = [1, 2], strides = [1, 1]} : vector<8x2xf32> to vector<1x2xf32>
    %215 = vector.broadcast %213 : vector<8x1xf32> to vector<8x2xf32>
    %216 = vector.broadcast %214 : vector<1x2xf32> to vector<8x2xf32>
    %217 = arith.mulf %215, %216 : vector<8x2xf32>
    %218 = vector.extract_strided_slice %211 {offsets = [0, 1], sizes = [8, 1], strides = [1, 1]} : vector<8x8xf32> to vector<8x1xf32>
    %219 = vector.extract_strided_slice %212 {offsets = [1, 0], sizes = [1, 2], strides = [1, 1]} : vector<8x2xf32> to vector<1x2xf32>
    %220 = vector.broadcast %218 : vector<8x1xf32> to vector<8x2xf32>
    %221 = vector.broadcast %219 : vector<1x2xf32> to vector<8x2xf32>
    %222 = arith.mulf %220, %221 : vector<8x2xf32>
    %223 = arith.addf %217, %222 : vector<8x2xf32>
    %224 = vector.extract_strided_slice %211 {offsets = [0, 2], sizes = [8, 1], strides = [1, 1]} : vector<8x8xf32> to vector<8x1xf32>
    %225 = vector.extract_strided_slice %212 {offsets = [2, 0], sizes = [1, 2], strides = [1, 1]} : vector<8x2xf32> to vector<1x2xf32>
    %226 = vector.broadcast %224 : vector<8x1xf32> to vector<8x2xf32>
    %227 = vector.broadcast %225 : vector<1x2xf32> to vector<8x2xf32>
    %228 = arith.mulf %226, %227 : vector<8x2xf32>
    %229 = arith.addf %223, %228 : vector<8x2xf32>
    %230 = vector.extract_strided_slice %211 {offsets = [0, 3], sizes = [8, 1], strides = [1, 1]} : vector<8x8xf32> to vector<8x1xf32>
    %231 = vector.extract_strided_slice %212 {offsets = [3, 0], sizes = [1, 2], strides = [1, 1]} : vector<8x2xf32> to vector<1x2xf32>
    %232 = vector.broadcast %230 : vector<8x1xf32> to vector<8x2xf32>
    %233 = vector.broadcast %231 : vector<1x2xf32> to vector<8x2xf32>
    %234 = arith.mulf %232, %233 : vector<8x2xf32>
    %235 = arith.addf %229, %234 : vector<8x2xf32>
    %236 = vector.extract_strided_slice %211 {offsets = [0, 4], sizes = [8, 1], strides = [1, 1]} : vector<8x8xf32> to vector<8x1xf32>
    %237 = vector.extract_strided_slice %212 {offsets = [4, 0], sizes = [1, 2], strides = [1, 1]} : vector<8x2xf32> to vector<1x2xf32>
    %238 = vector.broadcast %236 : vector<8x1xf32> to vector<8x2xf32>
    %239 = vector.broadcast %237 : vector<1x2xf32> to vector<8x2xf32>
    %240 = arith.mulf %238, %239 : vector<8x2xf32>
    %241 = arith.addf %235, %240 : vector<8x2xf32>
    %242 = vector.extract_strided_slice %211 {offsets = [0, 5], sizes = [8, 1], strides = [1, 1]} : vector<8x8xf32> to vector<8x1xf32>
    %243 = vector.extract_strided_slice %212 {offsets = [5, 0], sizes = [1, 2], strides = [1, 1]} : vector<8x2xf32> to vector<1x2xf32>
    %244 = vector.broadcast %242 : vector<8x1xf32> to vector<8x2xf32>
    %245 = vector.broadcast %243 : vector<1x2xf32> to vector<8x2xf32>
    %246 = arith.mulf %244, %245 : vector<8x2xf32>
    %247 = arith.addf %241, %246 : vector<8x2xf32>
    %248 = vector.extract_strided_slice %211 {offsets = [0, 6], sizes = [8, 1], strides = [1, 1]} : vector<8x8xf32> to vector<8x1xf32>
    %249 = vector.extract_strided_slice %212 {offsets = [6, 0], sizes = [1, 2], strides = [1, 1]} : vector<8x2xf32> to vector<1x2xf32>
    %250 = vector.broadcast %248 : vector<8x1xf32> to vector<8x2xf32>
    %251 = vector.broadcast %249 : vector<1x2xf32> to vector<8x2xf32>
    %252 = arith.mulf %250, %251 : vector<8x2xf32>
    %253 = arith.addf %247, %252 : vector<8x2xf32>
    %254 = vector.extract_strided_slice %211 {offsets = [0, 7], sizes = [8, 1], strides = [1, 1]} : vector<8x8xf32> to vector<8x1xf32>
    %255 = vector.extract_strided_slice %212 {offsets = [7, 0], sizes = [1, 2], strides = [1, 1]} : vector<8x2xf32> to vector<1x2xf32>
    %256 = vector.broadcast %254 : vector<8x1xf32> to vector<8x2xf32>
    %257 = vector.broadcast %255 : vector<1x2xf32> to vector<8x2xf32>
    %258 = arith.mulf %256, %257 : vector<8x2xf32>
    %259 = arith.addf %253, %258 : vector<8x2xf32>
    %c0_41 = arith.constant 0 : index
    %c0_42 = arith.constant 0 : index
    %260 = vector.load %arg17[%c0_41, %c0_42] : memref<1x2xf32, #tpu.memory_space<vmem>>, vector<1x2xf32>
    %261 = vector.broadcast %260 : vector<1x2xf32> to vector<8x2xf32>
    %262 = arith.addf %259, %261 : vector<8x2xf32>
    %c0_43 = arith.constant 0 : index
    %c0_44 = arith.constant 0 : index
    %263 = vector.load %arg18[%c0_43, %c0_44] : memref<2x2xf32, #tpu.memory_space<vmem>>, vector<2x2xf32>
    %264 = vector.extract_strided_slice %0 {offsets = [0, 2], sizes = [8, 1], strides = [1, 1]} : vector<8x4xf32> to vector<8x1xf32>
    %265 = vector.extract_strided_slice %263 {offsets = [0, 0], sizes = [1, 2], strides = [1, 1]} : vector<2x2xf32> to vector<1x2xf32>
    %266 = vector.broadcast %264 : vector<8x1xf32> to vector<8x2xf32>
    %267 = vector.broadcast %265 : vector<1x2xf32> to vector<8x2xf32>
    %268 = arith.mulf %266, %267 : vector<8x2xf32>
    %269 = arith.addf %262, %268 : vector<8x2xf32>
    %270 = vector.extract_strided_slice %0 {offsets = [0, 3], sizes = [8, 1], strides = [1, 1]} : vector<8x4xf32> to vector<8x1xf32>
    %271 = vector.extract_strided_slice %263 {offsets = [1, 0], sizes = [1, 2], strides = [1, 1]} : vector<2x2xf32> to vector<1x2xf32>
    %272 = vector.broadcast %270 : vector<8x1xf32> to vector<8x2xf32>
    %273 = vector.broadcast %271 : vector<1x2xf32> to vector<8x2xf32>
    %274 = arith.mulf %272, %273 : vector<8x2xf32>
    %275 = arith.addf %269, %274 : vector<8x2xf32>
    %c0_45 = arith.constant 0 : index
    %c0_46 = arith.constant 0 : index
    %276 = vector.load %arg19[%c0_45, %c0_46] : memref<8x2xf32, #tpu.memory_space<vmem>>, vector<8x2xf32>
    tpu.vector_store %arg19[%c0_45, %c0_46], %275 {strides = array<i32>} : memref<8x2xf32, #tpu.memory_space<vmem>>, vector<8x2xf32>,
    return
  }
  func.func @transform_0(%arg0: i32) -> (i32, i32) {
    %c0_i32 = arith.constant 0 : i32
    %c0_i32_0 = arith.constant 0 : i32
    return %arg0, %c0_i32 : i32, i32
  }
  func.func @transform_1(%arg0: i32) -> (i32, i32) {
    %c0_i32 = arith.constant 0 : i32
    %c0_i32_0 = arith.constant 0 : i32
    %c0_i32_1 = arith.constant 0 : i32
    return %c0_i32, %c0_i32_0 : i32, i32
  }
  func.func @transform_2(%arg0: i32) -> (i32, i32) {
    %c0_i32 = arith.constant 0 : i32
    %c0_i32_0 = arith.constant 0 : i32
    %c0_i32_1 = arith.constant 0 : i32
    return %c0_i32, %c0_i32_0 : i32, i32
  }
  func.func @transform_3(%arg0: i32) -> (i32, i32) {
    %c0_i32 = arith.constant 0 : i32
    %c0_i32_0 = arith.constant 0 : i32
    %c0_i32_1 = arith.constant 0 : i32
    return %c0_i32, %c0_i32_0 : i32, i32
  }
  func.func @transform_4(%arg0: i32) -> (i32, i32) {
    %c0_i32 = arith.constant 0 : i32
    %c0_i32_0 = arith.constant 0 : i32
    %c0_i32_1 = arith.constant 0 : i32
    return %c0_i32, %c0_i32_0 : i32, i32
  }
  func.func @transform_5(%arg0: i32) -> (i32, i32) {
    %c0_i32 = arith.constant 0 : i32
    %c0_i32_0 = arith.constant 0 : i32
    %c0_i32_1 = arith.constant 0 : i32
    return %c0_i32, %c0_i32_0 : i32, i32
  }
  func.func @transform_6(%arg0: i32) -> (i32, i32) {
    %c0_i32 = arith.constant 0 : i32
    %c0_i32_0 = arith.constant 0 : i32
    %c0_i32_1 = arith.constant 0 : i32
    return %c0_i32, %c0_i32_0 : i32, i32
  }
  func.func @transform_7(%arg0: i32) -> (i32, i32) {
    %c0_i32 = arith.constant 0 : i32
    %c0_i32_0 = arith.constant 0 : i32
    %c0_i32_1 = arith.constant 0 : i32
    return %c0_i32, %c0_i32_0 : i32, i32
  }
  func.func @transform_8(%arg0: i32) -> (i32, i32) {
    %c0_i32 = arith.constant 0 : i32
    %c0_i32_0 = arith.constant 0 : i32
    %c0_i32_1 = arith.constant 0 : i32
    return %c0_i32, %c0_i32_0 : i32, i32
  }
  func.func @transform_9(%arg0: i32) -> (i32, i32) {
    %c0_i32 = arith.constant 0 : i32
    %c0_i32_0 = arith.constant 0 : i32
    %c0_i32_1 = arith.constant 0 : i32
    return %c0_i32, %c0_i32_0 : i32, i32
  }
  func.func @transform_10(%arg0: i32) -> (i32, i32) {
    %c0_i32 = arith.constant 0 : i32
    %c0_i32_0 = arith.constant 0 : i32
    %c0_i32_1 = arith.constant 0 : i32
    return %c0_i32, %c0_i32_0 : i32, i32
  }
  func.func @transform_11(%arg0: i32) -> (i32, i32) {
    %c0_i32 = arith.constant 0 : i32
    %c0_i32_0 = arith.constant 0 : i32
    %c0_i32_1 = arith.constant 0 : i32
    return %c0_i32, %c0_i32_0 : i32, i32
  }
  func.func @transform_12(%arg0: i32) -> (i32, i32) {
    %c0_i32 = arith.constant 0 : i32
    %c0_i32_0 = arith.constant 0 : i32
    %c0_i32_1 = arith.constant 0 : i32
    return %c0_i32, %c0_i32_0 : i32, i32
  }
  func.func @transform_13(%arg0: i32) -> (i32, i32) {
    %c0_i32 = arith.constant 0 : i32
    %c0_i32_0 = arith.constant 0 : i32
    %c0_i32_1 = arith.constant 0 : i32
    return %c0_i32, %c0_i32_0 : i32, i32
  }
  func.func @transform_14(%arg0: i32) -> (i32, i32) {
    %c0_i32 = arith.constant 0 : i32
    %c0_i32_0 = arith.constant 0 : i32
    %c0_i32_1 = arith.constant 0 : i32
    return %c0_i32, %c0_i32_0 : i32, i32
  }
  func.func @transform_15(%arg0: i32) -> (i32, i32) {
    %c0_i32 = arith.constant 0 : i32
    %c0_i32_0 = arith.constant 0 : i32
    %c0_i32_1 = arith.constant 0 : i32
    return %c0_i32, %c0_i32_0 : i32, i32
  }
  func.func @transform_16(%arg0: i32) -> (i32, i32) {
    %c0_i32 = arith.constant 0 : i32
    %c0_i32_0 = arith.constant 0 : i32
    %c0_i32_1 = arith.constant 0 : i32
    return %c0_i32, %c0_i32_0 : i32, i32
  }
  func.func @transform_17(%arg0: i32) -> (i32, i32) {
    %c0_i32 = arith.constant 0 : i32
    %c0_i32_0 = arith.constant 0 : i32
    %c0_i32_1 = arith.constant 0 : i32
    return %c0_i32, %c0_i32_0 : i32, i32
  }
  func.func @transform_18(%arg0: i32) -> (i32, i32) {
    %c0_i32 = arith.constant 0 : i32
    %c0_i32_0 = arith.constant 0 : i32
    return %arg0, %c0_i32 : i32, i32
  }
}

</mosaic_0001>

<llo_original>
// kernel: tpu_custom_call.1
$region0: #{tpu_custom_call.1}
  #allocation0 [shape = 'u32[]', space=smem, size = 0x4, offset = 0x4, fixed_abs, tag = 'smem constant byte address 0x4 - core index']
  #allocation1 [shape = 'u32[144,128]{1,0:T(1,128)}', space=vmem, size = 0x12000, scoped, tag = 'internal scratch']
  %s0 = inlined_call_operand.vmem [shape: f32[8,4], index: 0, kind: input, shape index: {}]
  %s1 = inlined_call_operand.vmem [shape: f32[4,256], index: 1, kind: input, shape index: {}]
  %s2 = inlined_call_operand.vmem [shape: f32[1,256], index: 2, kind: input, shape index: {}]
  %s3 = inlined_call_operand.hbm [shape: f32[256,256], index: 3, kind: input, shape index: {}]
  %s4 = inlined_call_operand.vmem [shape: f32[1,256], index: 4, kind: input, shape index: {}]
  %s5 = inlined_call_operand.hbm [shape: f32[256,256], index: 5, kind: input, shape index: {}]
  %s6 = inlined_call_operand.vmem [shape: f32[1,256], index: 6, kind: input, shape index: {}]
  %s7 = inlined_call_operand.hbm [shape: f32[256,256], index: 7, kind: input, shape index: {}]
  %s8 = inlined_call_operand.vmem [shape: f32[1,256], index: 8, kind: input, shape index: {}]
  %s9 = inlined_call_operand.vmem [shape: f32[256,16], index: 9, kind: input, shape index: {}]
  %s10 = inlined_call_operand.vmem [shape: f32[1,16], index: 10, kind: input, shape index: {}]
  %s11 = inlined_call_operand.vmem [shape: f32[16,8], index: 11, kind: input, shape index: {}]
  %s12 = inlined_call_operand.vmem [shape: f32[1,8], index: 12, kind: input, shape index: {}]
  %s13 = inlined_call_operand.vmem [shape: f32[8,8], index: 13, kind: input, shape index: {}]
  %s14 = inlined_call_operand.vmem [shape: f32[1,8], index: 14, kind: input, shape index: {}]
  %s15 = inlined_call_operand.vmem [shape: f32[8,2], index: 15, kind: input, shape index: {}]
  %s16 = inlined_call_operand.vmem [shape: f32[1,2], index: 16, kind: input, shape index: {}]
  %s17 = inlined_call_operand.vmem [shape: f32[2,2], index: 17, kind: input, shape index: {}]
  %s18 = inlined_call_operand.vmem [shape: f32[8,2], index: 18, kind: output, shape index: {}]
  %s19 = sld [smem:[#allocation0]]
  $region94: #{tpu_custom_call.1} parent=0
    _
  %s21 = ssub.s32 1, %s19
  %s22 = scalar_select 0, %s21, %s19
  $region1: #{tpu_custom_call.1} parent=0
    #allocation2 [shape = 'u8[262144]{0}', space=vmem, size = 0x40000, scoped, tag = 'input window, operand 3, single buffered']
    #allocation3 [shape = 's32[1]{0}', space=sflag, size = 0x4, scoped, tag = 'scoped memory for tpu_custom_call.1']
    #allocation4 [shape = 'u8[262144]{0}', space=vmem, size = 0x40000, scoped, tag = 'input window, operand 5, single buffered']
    #allocation5 [shape = 's32[1]{0}', space=sflag, size = 0x4, scoped, tag = 'scoped memory for tpu_custom_call.1']
    #allocation6 [shape = 'u8[262144]{0}', space=vmem, size = 0x40000, scoped, tag = 'input window, operand 7, single buffered']
    %23 = vsyncpa [#allocation3], 0
    %24 = vsyncpa [#allocation5], 0
    // Predicated region
    $region2: #{tpu_custom_call.1} parent=1 // pred_check
      _
    $region3: #{tpu_custom_call.1} parent=1 // pred_check_branch
      %26 = sbr.rel (0) target = $region5
    $region4: #{tpu_custom_call.1} parent=1 // pred_region
      _
    $region5: #{tpu_custom_call.1} parent=1 // pred_fallthru
      _
    // Predicated region
    $region6: #{tpu_custom_call.1} parent=1 // pred_check
      _
    $region7: #{tpu_custom_call.1} parent=1 // pred_check_branch
      %28 = sbr.rel (0) target = $region9
    $region8: #{tpu_custom_call.1} parent=1 // pred_region
      _
    $region9: #{tpu_custom_call.1} parent=1 // pred_fallthru
      _
    // Predicated region
    $region10: #{tpu_custom_call.1} parent=1 // pred_check
      _
    $region11: #{tpu_custom_call.1} parent=1 // pred_check_branch
      %30 = sbr.rel (0) target = $region13
    $region12: #{tpu_custom_call.1} parent=1 // pred_region
      _
    $region13: #{tpu_custom_call.1} parent=1 // pred_fallthru
      _
    // Predicated region
    $region14: #{tpu_custom_call.1} parent=1 // pred_check
      _
    $region15: #{tpu_custom_call.1} parent=1 // pred_check_branch
      %32 = sbr.rel (0) target = $region17
    $region16: #{tpu_custom_call.1} parent=1 // pred_region
      %s34 = ssub.s32 8192, 8192
      %35 = vsyncadd [#allocation3], %s34
      %s36 = sshll.u32 [#allocation2], 4
      %s37 = int_to_ptr.vmem [resolvable:$true] %s36
      %42 = dma.hbm_to_vmem [thread:$0]  %s3, 8192, %s37, [#allocation3], 256, 256, 16
    $region17: #{tpu_custom_call.1} parent=1 // pred_fallthru
      _
    // Predicated region
    $region18: #{tpu_custom_call.1} parent=1 // pred_check
      _
    $region19: #{tpu_custom_call.1} parent=1 // pred_check_branch
      %44 = sbr.rel (0) target = $region21
    $region20: #{tpu_custom_call.1} parent=1 // pred_region
      _
    $region21: #{tpu_custom_call.1} parent=1 // pred_fallthru
      _
    // Predicated region
    $region22: #{tpu_custom_call.1} parent=1 // pred_check
      _
    $region23: #{tpu_custom_call.1} parent=1 // pred_check_branch
      %46 = sbr.rel (0) target = $region25
    $region24: #{tpu_custom_call.1} parent=1 // pred_region
      %s48 = ssub.s32 8192, 8192
      %49 = vsyncadd [#allocation5], %s48
      %s50 = sshll.u32 [#allocation4], 4
      %s51 = int_to_ptr.vmem [resolvable:$true] %s50
      %56 = dma.hbm_to_vmem [thread:$0]  %s5, 8192, %s51, [#allocation5], 256, 256, 16
    $region25: #{tpu_custom_call.1} parent=1 // pred_fallthru
      _
    // Predicated region
    $region26: #{tpu_custom_call.1} parent=1 // pred_check
      _
    $region27: #{tpu_custom_call.1} parent=1 // pred_check_branch
      %58 = sbr.rel (0) target = $region29
    $region28: #{tpu_custom_call.1} parent=1 // pred_region
      _
    $region29: #{tpu_custom_call.1} parent=1 // pred_fallthru
      _
    // Predicated region
    $region30: #{tpu_custom_call.1} parent=1 // pred_check
      _
    $region31: #{tpu_custom_call.1} parent=1 // pred_check_branch
      %60 = sbr.rel (0) target = $region33
    $region32: #{tpu_custom_call.1} parent=1 // pred_region
      %s62 = ssub.s32 8192, 8192
      %63 = vsyncadd [#allocation5], %s62
      %s64 = sshll.u32 [#allocation6], 4
      %s65 = int_to_ptr.vmem [resolvable:$true] %s64
      %70 = dma.hbm_to_vmem [thread:$0]  %s7, 8192, %s65, [#allocation5], 256, 256, 16
    $region33: #{tpu_custom_call.1} parent=1 // pred_fallthru
      _
    // Predicated region
    $region34: #{tpu_custom_call.1} parent=1 // pred_check
      _
    $region35: #{tpu_custom_call.1} parent=1 // pred_check_branch
      %72 = sbr.rel (0) target = $region37
    $region36: #{tpu_custom_call.1} parent=1 // pred_region
      _
    $region37: #{tpu_custom_call.1} parent=1 // pred_fallthru
      _
    // Predicated region
    $region38: #{tpu_custom_call.1} parent=1 // pred_check
      _
    $region39: #{tpu_custom_call.1} parent=1 // pred_check_branch
      %74 = sbr.rel (0) target = $region41
    $region40: #{tpu_custom_call.1} parent=1 // pred_region
      _
    $region41: #{tpu_custom_call.1} parent=1 // pred_fallthru
      _
    // Predicated region
    $region42: #{tpu_custom_call.1} parent=1 // pred_check
      _
    $region43: #{tpu_custom_call.1} parent=1 // pred_check_branch
      %76 = sbr.rel (0) target = $region45
    $region44: #{tpu_custom_call.1} parent=1 // pred_region
      _
    $region45: #{tpu_custom_call.1} parent=1 // pred_fallthru
      _
    // Predicated region
    $region46: #{tpu_custom_call.1} parent=1 // pred_check
      _
    $region47: #{tpu_custom_call.1} parent=1 // pred_check_branch
      %78 = sbr.rel (0) target = $region49
    $region48: #{tpu_custom_call.1} parent=1 // pred_region
      _
    $region49: #{tpu_custom_call.1} parent=1 // pred_fallthru
      _
    // Predicated region
    $region50: #{tpu_custom_call.1} parent=1 // pred_check
      _
    $region51: #{tpu_custom_call.1} parent=1 // pred_check_branch
      %80 = sbr.rel (0) target = $region53
    $region52: #{tpu_custom_call.1} parent=1 // pred_region
      _
    $region53: #{tpu_custom_call.1} parent=1 // pred_fallthru
      _
    // Predicated region
    $region54: #{tpu_custom_call.1} parent=1 // pred_check
      _
    $region55: #{tpu_custom_call.1} parent=1 // pred_check_branch
      %82 = sbr.rel (0) target = $region57
    $region56: #{tpu_custom_call.1} parent=1 // pred_region
      _
    $region57: #{tpu_custom_call.1} parent=1 // pred_fallthru
      _
    // Predicated region
    $region58: #{tpu_custom_call.1} parent=1 // pred_check
      _
    $region59: #{tpu_custom_call.1} parent=1 // pred_check_branch
      %84 = sbr.rel (0) target = $region61
    $region60: #{tpu_custom_call.1} parent=1 // pred_region
      _
    $region61: #{tpu_custom_call.1} parent=1 // pred_fallthru
      _
    // Predicated region
    $region62: #{tpu_custom_call.1} parent=1 // pred_check
      _
    $region63: #{tpu_custom_call.1} parent=1 // pred_check_branch
      %86 = sbr.rel (0) target = $region65
    $region64: #{tpu_custom_call.1} parent=1 // pred_region
      _
    $region65: #{tpu_custom_call.1} parent=1 // pred_fallthru
      _
    // Predicated region
    $region66: #{tpu_custom_call.1} parent=1 // pred_check
      _
    $region67: #{tpu_custom_call.1} parent=1 // pred_check_branch
      %88 = sbr.rel (0) target = $region69
    $region68: #{tpu_custom_call.1} parent=1 // pred_region
      _
    $region69: #{tpu_custom_call.1} parent=1 // pred_fallthru
      _
    // Predicated region
    $region70: #{tpu_custom_call.1} parent=1 // pred_check
      _
    $region71: #{tpu_custom_call.1} parent=1 // pred_check_branch
      %90 = sbr.rel (0) target = $region73
    $region72: #{tpu_custom_call.1} parent=1 // pred_region
      _
    $region73: #{tpu_custom_call.1} parent=1 // pred_fallthru
      _
    // Predicated region
    $region74: #{tpu_custom_call.1} parent=1 // pred_check
      _
    $region75: #{tpu_custom_call.1} parent=1 // pred_check_branch
      %92 = sbr.rel (0) target = $region77
    $region76: #{tpu_custom_call.1} parent=1 // pred_region
      %93 = dma.done [#allocation3], 8192
    $region77: #{tpu_custom_call.1} parent=1 // pred_fallthru
      _
    // Predicated region
    $region78: #{tpu_custom_call.1} parent=1 // pred_check
      _
    $region79: #{tpu_custom_call.1} parent=1 // pred_check_branch
      %95 = sbr.rel (0) target = $region81
    $region80: #{tpu_custom_call.1} parent=1 // pred_region
      %96 = dma.done [#allocation5], 8192
    $region81: #{tpu_custom_call.1} parent=1 // pred_fallthru
      _
    // Predicated region
    $region82: #{tpu_custom_call.1} parent=1 // pred_check
      _
    $region83: #{tpu_custom_call.1} parent=1 // pred_check_branch
      %98 = sbr.rel (0) target = $region85
    $region84: #{tpu_custom_call.1} parent=1 // pred_region
      %99 = dma.done [#allocation5], 8192
    $region85: #{tpu_custom_call.1} parent=1 // pred_fallthru
      _
    %v100 = vld [vmem:[%s0] sm:$0xff]
    %v101 = vld [vmem:[%s1] sm:$0xff]
    %103 = vset.pattern.permute.xlu0 0
    %104 = vperm.xlu0 %103, %v100
    %v105 = vpop.permute.xlu0 %104
    %v108 = vlaneseq
    %v109 = vshrl.u32 %v108, 7
    %v110 = vsub.s32 0, %v109
    %v111 = vrot.slane %v101, %v110
    %v112 = vlaneseq
    %v113 = vshrl.u32 %v112, 7
    %v114 = vsub.s32 4, %v113
    %v115 = vrot.slane %v101, %v114
    %v118 = vlaneseq
    %v119 = vshrl.u32 %v118, 7
    %v120 = vsub.s32 0, %v119
    %v121 = vrot.slane %v111, %v120
    %v122 = vlaneseq
    %v123 = vshrl.u32 %v122, 7
    %v124 = vsub.s32 0, %v123
    %v125 = vrot.slane %v115, %v124
    %v126 = vmul.f32 %v105, %v121
    %v127 = vmul.f32 %v105, %v125
    %128 = vset.pattern.permute.xlu0 1
    %129 = vperm.xlu0 %128, %v100
    %v130 = vpop.permute.xlu0 %129
    %v132 = vlaneseq
    %v133 = vshrl.u32 %v132, 7
    %v134 = vsub.s32 1, %v133
    %v135 = vrot.slane %v101, %v134
    %v136 = vlaneseq
    %v137 = vshrl.u32 %v136, 7
    %v138 = vsub.s32 5, %v137
    %v139 = vrot.slane %v101, %v138
    %v142 = vlaneseq
    %v143 = vshrl.u32 %v142, 7
    %v144 = vsub.s32 1, %v143
    %v145 = vrot.slane %v135, %v144
    %v146 = vlaneseq
    %v147 = vshrl.u32 %v146, 7
    %v148 = vsub.s32 1, %v147
    %v149 = vrot.slane %v139, %v148
    %v150 = vmul.f32 %v130, %v145
    %v151 = vmul.f32 %v130, %v149
    %v152 = vadd.f32 %v126, %v150
    %v153 = vadd.f32 %v127, %v151
    %154 = vset.pattern.permute.xlu0 2
    %155 = vperm.xlu0 %154, %v100
    %v156 = vpop.permute.xlu0 %155
    %v158 = vlaneseq
    %v159 = vshrl.u32 %v158, 7
    %v160 = vsub.s32 2, %v159
    %v161 = vrot.slane %v101, %v160
    %v162 = vlaneseq
    %v163 = vshrl.u32 %v162, 7
    %v164 = vsub.s32 6, %v163
    %v165 = vrot.slane %v101, %v164
    %v168 = vlaneseq
    %v169 = vshrl.u32 %v168, 7
    %v170 = vsub.s32 2, %v169
    %v171 = vrot.slane %v161, %v170
    %v172 = vlaneseq
    %v173 = vshrl.u32 %v172, 7
    %v174 = vsub.s32 2, %v173
    %v175 = vrot.slane %v165, %v174
    %v176 = vmul.f32 %v156, %v171
    %v177 = vmul.f32 %v156, %v175
    %v178 = vadd.f32 %v152, %v176
    %v179 = vadd.f32 %v153, %v177
    %180 = vset.pattern.permute.xlu0 3
    %181 = vperm.xlu0 %180, %v100
    %v182 = vpop.permute.xlu0 %181
    %v184 = vlaneseq
    %v185 = vshrl.u32 %v184, 7
    %v186 = vsub.s32 3, %v185
    %v187 = vrot.slane %v101, %v186
    %v188 = vlaneseq
    %v189 = vshrl.u32 %v188, 7
    %v190 = vsub.s32 7, %v189
    %v191 = vrot.slane %v101, %v190
    %v194 = vlaneseq
    %v195 = vshrl.u32 %v194, 7
    %v196 = vsub.s32 3, %v195
    %v197 = vrot.slane %v187, %v196
    %v198 = vlaneseq
    %v199 = vshrl.u32 %v198, 7
    %v200 = vsub.s32 3, %v199
    %v201 = vrot.slane %v191, %v200
    %v202 = vmul.f32 %v182, %v197
    %v203 = vmul.f32 %v182, %v201
    %v204 = vadd.f32 %v178, %v202
    %v205 = vadd.f32 %v179, %v203
    %v206 = vld [vmem:[%s2] sm:$0x3]
    %v208 = vlaneseq
    %v209 = vshrl.u32 %v208, 7
    %v210 = vsub.s32 0, %v209
    %v211 = vrot.slane %v206, %v210
    %v212 = vlaneseq
    %v213 = vshrl.u32 %v212, 7
    %v214 = vsub.s32 1, %v213
    %v215 = vrot.slane %v206, %v214
    %v218 = vadd.f32 %v204, %v211
    %v219 = vadd.f32 %v205, %v215
    %v220 = vmax.f32 %v218, 0.0
    %v221 = vmax.f32 %v219, 0.0
    %v222 = vld [vmem:[#allocation2] sm:$0xff]
    %v223 = vld [vmem:[#allocation2 + $0x8] sm:$0xff]
    %v224 = vld [vmem:[#allocation2 + $0x10] sm:$0xff]
    %v225 = vld [vmem:[#allocation2 + $0x18] sm:$0xff]
    %v226 = vld [vmem:[#allocation2 + $0x20] sm:$0xff]
    %v227 = vld [vmem:[#allocation2 + $0x28] sm:$0xff]
    %v228 = vld [vmem:[#allocation2 + $0x30] sm:$0xff]
    %v229 = vld [vmem:[#allocation2 + $0x38] sm:$0xff]
    %v230 = vld [vmem:[#allocation2 + $0x40] sm:$0xff]
    %v231 = vld [vmem:[#allocation2 + $0x48] sm:$0xff]
    %v232 = vld [vmem:[#allocation2 + $0x50] sm:$0xff]
    %v233 = vld [vmem:[#allocation2 + $0x58] sm:$0xff]
    %v234 = vld [vmem:[#allocation2 + $0x60] sm:$0xff]
    %v235 = vld [vmem:[#allocation2 + $0x68] sm:$0xff]
    %v236 = vld [vmem:[#allocation2 + $0x70] sm:$0xff]
    %v237 = vld [vmem:[#allocation2 + $0x78] sm:$0xff]
    %v238 = vld [vmem:[#allocation2 + $0x80] sm:$0xff]
    %v239 = vld [vmem:[#allocation2 + $0x88] sm:$0xff]
    %v240 = vld [vmem:[#allocation2 + $0x90] sm:$0xff]
    %v241 = vld [vmem:[#allocation2 + $0x98] sm:$0xff]
    %v242 = vld [vmem:[#allocation2 + $0xa0] sm:$0xff]
    %v243 = vld [vmem:[#allocation2 + $0xa8] sm:$0xff]
    %v244 = vld [vmem:[#allocation2 + $0xb0] sm:$0xff]
    %v245 = vld [vmem:[#allocation2 + $0xb8] sm:$0xff]
    %v246 = vld [vmem:[#allocation2 + $0xc0] sm:$0xff]
    %v247 = vld [vmem:[#allocation2 + $0xc8] sm:$0xff]
    %v248 = vld [vmem:[#allocation2 + $0xd0] sm:$0xff]
    %v249 = vld [vmem:[#allocation2 + $0xd8] sm:$0xff]
    %v250 = vld [vmem:[#allocation2 + $0xe0] sm:$0xff]
    %v251 = vld [vmem:[#allocation2 + $0xe8] sm:$0xff]
    %v252 = vld [vmem:[#allocation2 + $0xf0] sm:$0xff]
    %v253 = vld [vmem:[#allocation2 + $0xf8] sm:$0xff]
    %v254 = vld [vmem:[#allocation2 + $0x100] sm:$0xff]
    %v255 = vld [vmem:[#allocation2 + $0x108] sm:$0xff]
    %v256 = vld [vmem:[#allocation2 + $0x110] sm:$0xff]
    %v257 = vld [vmem:[#allocation2 + $0x118] sm:$0xff]
    %v258 = vld [vmem:[#allocation2 + $0x120] sm:$0xff]
    %v259 = vld [vmem:[#allocation2 + $0x128] sm:$0xff]
    %v260 = vld [vmem:[#allocation2 + $0x130] sm:$0xff]
    %v261 = vld [vmem:[#allocation2 + $0x138] sm:$0xff]
    %v262 = vld [vmem:[#allocation2 + $0x140] sm:$0xff]
    %v263 = vld [vmem:[#allocation2 + $0x148] sm:$0xff]
    %v264 = vld [vmem:[#allocation2 + $0x150] sm:$0xff]
    %v265 = vld [vmem:[#allocation2 + $0x158] sm:$0xff]
    %v266 = vld [vmem:[#allocation2 + $0x160] sm:$0xff]
    %v267 = vld [vmem:[#allocation2 + $0x168] sm:$0xff]
    %v268 = vld [vmem:[#allocation2 + $0x170] sm:$0xff]
    %v269 = vld [vmem:[#allocation2 + $0x178] sm:$0xff]
    %v270 = vld [vmem:[#allocation2 + $0x180] sm:$0xff]
    %v271 = vld [vmem:[#allocation2 + $0x188] sm:$0xff]
    %v272 = vld [vmem:[#allocation2 + $0x190] sm:$0xff]
    %v273 = vld [vmem:[#allocation2 + $0x198] sm:$0xff]
    %v274 = vld [vmem:[#allocation2 + $0x1a0] sm:$0xff]
    %v275 = vld [vmem:[#allocation2 + $0x1a8] sm:$0xff]
    %v276 = vld [vmem:[#allocation2 + $0x1b0] sm:$0xff]
    %v277 = vld [vmem:[#allocation2 + $0x1b8] sm:$0xff]
    %v278 = vld [vmem:[#allocation2 + $0x1c0] sm:$0xff]
    %v279 = vld [vmem:[#allocation2 + $0x1c8] sm:$0xff]
    %v280 = vld [vmem:[#allocation2 + $0x1d0] sm:$0xff]
    %v281 = vld [vmem:[#allocation2 + $0x1d8] sm:$0xff]
    %v282 = vld [vmem:[#allocation2 + $0x1e0] sm:$0xff]
    %v283 = vld [vmem:[#allocation2 + $0x1e8] sm:$0xff]
    %v284 = vld [vmem:[#allocation2 + $0x1f0] sm:$0xff]
    %v285 = vld [vmem:[#allocation2 + $0x1f8] sm:$0xff]
    %v286 = vld [vmem:[%s4] sm:$0x3]
    %v288 = vlaneseq
    %v289 = vshrl.u32 %v288, 7
    %v290 = vsub.s32 0, %v289
    %v291 = vrot.slane %v286, %v290
    %v292 = vlaneseq
    %v293 = vshrl.u32 %v292, 7
    %v294 = vsub.s32 1, %v293
    %v295 = vrot.slane %v286, %v294
    %298 = vmatprep.subr.mxu0 %v223
    %299 = vmatpush1.msra.mxu0 %v222
    %300 = vmatprep.subr.mxu0 %v225
    %301 = vmatpush1.msra.mxu0 %v224
    %302 = vmatprep.subr.mxu0 %v227
    %303 = vmatpush1.msra.mxu0 %v226
    %304 = vmatprep.subr.mxu0 %v229
    %305 = vmatpush1.msra.mxu0 %v228
    %306 = vmatprep.subr.mxu0 %v231
    %307 = vmatpush1.msra.mxu0 %v230
    %308 = vmatprep.subr.mxu0 %v233
    %309 = vmatpush1.msra.mxu0 %v232
    %310 = vmatprep.subr.mxu0 %v235
    %311 = vmatpush1.msra.mxu0 %v234
    %312 = vmatprep.subr.mxu0 %v237
    %313 = vmatpush1.msra.mxu0 %v236
    %314 = vmatprep.subr.mxu0 %v239
    %315 = vmatpush1.msra.mxu0 %v238
    %316 = vmatprep.subr.mxu0 %v241
    %317 = vmatpush1.msra.mxu0 %v240
    %318 = vmatprep.subr.mxu0 %v243
    %319 = vmatpush1.msra.mxu0 %v242
    %320 = vmatprep.subr.mxu0 %v245
    %321 = vmatpush1.msra.mxu0 %v244
    %322 = vmatprep.subr.mxu0 %v247
    %323 = vmatpush1.msra.mxu0 %v246
    %324 = vmatprep.subr.mxu0 %v249
    %325 = vmatpush1.msra.mxu0 %v248
    %326 = vmatprep.subr.mxu0 %v251
    %327 = vmatpush1.msra.mxu0 %v250
    %328 = vmatprep.subr.mxu0 %v253
    %329 = vmatpush1.msra.mxu0 %v252
    %330 = vmatprep.subr.mxu0 %v255
    %331 = vmatpush1.msra.mxu0 %v254
    %332 = vmatprep.subr.mxu0 %v257
    %333 = vmatpush1.msra.mxu0 %v256
    %334 = vmatprep.subr.mxu0 %v259
    %335 = vmatpush1.msra.mxu0 %v258
    %336 = vmatprep.subr.mxu0 %v261
    %337 = vmatpush1.msra.mxu0 %v260
    %338 = vmatprep.subr.mxu0 %v263
    %339 = vmatpush1.msra.mxu0 %v262
    %340 = vmatprep.subr.mxu0 %v265
    %341 = vmatpush1.msra.mxu0 %v264
    %342 = vmatprep.subr.mxu0 %v267
    %343 = vmatpush1.msra.mxu0 %v266
    %344 = vmatprep.subr.mxu0 %v269
    %345 = vmatpush1.msra.mxu0 %v268
    %346 = vmatprep.subr.mxu0 %v271
    %347 = vmatpush1.msra.mxu0 %v270
    %348 = vmatprep.subr.mxu0 %v273
    %349 = vmatpush1.msra.mxu0 %v272
    %350 = vmatprep.subr.mxu0 %v275
    %351 = vmatpush1.msra.mxu0 %v274
    %352 = vmatprep.subr.mxu0 %v277
    %353 = vmatpush1.msra.mxu0 %v276
    %354 = vmatprep.subr.mxu0 %v279
    %355 = vmatpush1.msra.mxu0 %v278
    %356 = vmatprep.subr.mxu0 %v281
    %357 = vmatpush1.msra.mxu0 %v280
    %358 = vmatprep.subr.mxu0 %v283
    %359 = vmatpush1.msra.mxu0 %v282
    %360 = vmatprep.subr.mxu0 %v285
    %361 = vmatpush1.msra.mxu0 %v284
    %362 = vmatprep.mubr.f32.mxu0 %v221
    %363 = vmatmul.mubr.f32.gmra.mrb[0].mxu0 %v220
    %v364 = vpop.f32.mrb[0].mxu0
    %v365 = vadd.f32 %v291, %v364
    %v366 = vpop.f32.mrb[0].mxu0
    %v367 = vadd.f32 %v295, %v366
    %368 = vdwg.mxu0
    %v369 = vmax.f32 %v365, 0.0
    %v370 = vmax.f32 %v367, 0.0
    %v371 = vld [vmem:[#allocation4] sm:$0xff]
    %v372 = vld [vmem:[#allocation4 + $0x8] sm:$0xff]
    %v373 = vld [vmem:[#allocation4 + $0x10] sm:$0xff]
    %v374 = vld [vmem:[#allocation4 + $0x18] sm:$0xff]
    %v375 = vld [vmem:[#allocation4 + $0x20] sm:$0xff]
    %v376 = vld [vmem:[#allocation4 + $0x28] sm:$0xff]
    %v377 = vld [vmem:[#allocation4 + $0x30] sm:$0xff]
    %v378 = vld [vmem:[#allocation4 + $0x38] sm:$0xff]
    %v379 = vld [vmem:[#allocation4 + $0x40] sm:$0xff]
    %v380 = vld [vmem:[#allocation4 + $0x48] sm:$0xff]
    %v381 = vld [vmem:[#allocation4 + $0x50] sm:$0xff]
    %v382 = vld [vmem:[#allocation4 + $0x58] sm:$0xff]
    %v383 = vld [vmem:[#allocation4 + $0x60] sm:$0xff]
    %v384 = vld [vmem:[#allocation4 + $0x68] sm:$0xff]
    %v385 = vld [vmem:[#allocation4 + $0x70] sm:$0xff]
    %v386 = vld [vmem:[#allocation4 + $0x78] sm:$0xff]
    %v387 = vld [vmem:[#allocation4 + $0x80] sm:$0xff]
    %v388 = vld [vmem:[#allocation4 + $0x88] sm:$0xff]
    %v389 = vld [vmem:[#allocation4 + $0x90] sm:$0xff]
    %v390 = vld [vmem:[#allocation4 + $0x98] sm:$0xff]
    %v391 = vld [vmem:[#allocation4 + $0xa0] sm:$0xff]
    %v392 = vld [vmem:[#allocation4 + $0xa8] sm:$0xff]
    %v393 = vld [vmem:[#allocation4 + $0xb0] sm:$0xff]
    %v394 = vld [vmem:[#allocation4 + $0xb8] sm:$0xff]
    %v395 = vld [vmem:[#allocation4 + $0xc0] sm:$0xff]
    %v396 = vld [vmem:[#allocation4 + $0xc8] sm:$0xff]
    %v397 = vld [vmem:[#allocation4 + $0xd0] sm:$0xff]
    %v398 = vld [vmem:[#allocation4 + $0xd8] sm:$0xff]
    %v399 = vld [vmem:[#allocation4 + $0xe0] sm:$0xff]
    %v400 = vld [vmem:[#allocation4 + $0xe8] sm:$0xff]
    %v401 = vld [vmem:[#allocation4 + $0xf0] sm:$0xff]
    %v402 = vld [vmem:[#allocation4 + $0xf8] sm:$0xff]
    %v403 = vld [vmem:[#allocation4 + $0x100] sm:$0xff]
    %v404 = vld [vmem:[#allocation4 + $0x108] sm:$0xff]
    %v405 = vld [vmem:[#allocation4 + $0x110] sm:$0xff]
    %v406 = vld [vmem:[#allocation4 + $0x118] sm:$0xff]
    %v407 = vld [vmem:[#allocation4 + $0x120] sm:$0xff]
    %v408 = vld [vmem:[#allocation4 + $0x128] sm:$0xff]
    %v409 = vld [vmem:[#allocation4 + $0x130] sm:$0xff]
    %v410 = vld [vmem:[#allocation4 + $0x138] sm:$0xff]
    %v411 = vld [vmem:[#allocation4 + $0x140] sm:$0xff]
    %v412 = vld [vmem:[#allocation4 + $0x148] sm:$0xff]
    %v413 = vld [vmem:[#allocation4 + $0x150] sm:$0xff]
    %v414 = vld [vmem:[#allocation4 + $0x158] sm:$0xff]
    %v415 = vld [vmem:[#allocation4 + $0x160] sm:$0xff]
    %v416 = vld [vmem:[#allocation4 + $0x168] sm:$0xff]
    %v417 = vld [vmem:[#allocation4 + $0x170] sm:$0xff]
    %v418 = vld [vmem:[#allocation4 + $0x178] sm:$0xff]
    %v419 = vld [vmem:[#allocation4 + $0x180] sm:$0xff]
    %v420 = vld [vmem:[#allocation4 + $0x188] sm:$0xff]
    %v421 = vld [vmem:[#allocation4 + $0x190] sm:$0xff]
    %v422 = vld [vmem:[#allocation4 + $0x198] sm:$0xff]
    %v423 = vld [vmem:[#allocation4 + $0x1a0] sm:$0xff]
    %v424 = vld [vmem:[#allocation4 + $0x1a8] sm:$0xff]
    %v425 = vld [vmem:[#allocation4 + $0x1b0] sm:$0xff]
    %v426 = vld [vmem:[#allocation4 + $0x1b8] sm:$0xff]
    %v427 = vld [vmem:[#allocation4 + $0x1c0] sm:$0xff]
    %v428 = vld [vmem:[#allocation4 + $0x1c8] sm:$0xff]
    %v429 = vld [vmem:[#allocation4 + $0x1d0] sm:$0xff]
    %v430 = vld [vmem:[#allocation4 + $0x1d8] sm:$0xff]
    %v431 = vld [vmem:[#allocation4 + $0x1e0] sm:$0xff]
    %v432 = vld [vmem:[#allocation4 + $0x1e8] sm:$0xff]
    %v433 = vld [vmem:[#allocation4 + $0x1f0] sm:$0xff]
    %v434 = vld [vmem:[#allocation4 + $0x1f8] sm:$0xff]
    %v435 = vld [vmem:[%s6] sm:$0x3]
    %v437 = vlaneseq
    %v438 = vshrl.u32 %v437, 7
    %v439 = vsub.s32 0, %v438
    %v440 = vrot.slane %v435, %v439
    %v441 = vlaneseq
    %v442 = vshrl.u32 %v441, 7
    %v443 = vsub.s32 1, %v442
    %v444 = vrot.slane %v435, %v443
    %447 = vmatprep.subr.mxu0 %v372
    %448 = vmatpush1.msra.mxu0 %v371
    %449 = vmatprep.subr.mxu0 %v374
    %450 = vmatpush1.msra.mxu0 %v373
    %451 = vmatprep.subr.mxu0 %v376
    %452 = vmatpush1.msra.mxu0 %v375
    %453 = vmatprep.subr.mxu0 %v378
    %454 = vmatpush1.msra.mxu0 %v377
    %455 = vmatprep.subr.mxu0 %v380
    %456 = vmatpush1.msra.mxu0 %v379
    %457 = vmatprep.subr.mxu0 %v382
    %458 = vmatpush1.msra.mxu0 %v381
    %459 = vmatprep.subr.mxu0 %v384
    %460 = vmatpush1.msra.mxu0 %v383
    %461 = vmatprep.subr.mxu0 %v386
    %462 = vmatpush1.msra.mxu0 %v385
    %463 = vmatprep.subr.mxu0 %v388
    %464 = vmatpush1.msra.mxu0 %v387
    %465 = vmatprep.subr.mxu0 %v390
    %466 = vmatpush1.msra.mxu0 %v389
    %467 = vmatprep.subr.mxu0 %v392
    %468 = vmatpush1.msra.mxu0 %v391
    %469 = vmatprep.subr.mxu0 %v394
    %470 = vmatpush1.msra.mxu0 %v393
    %471 = vmatprep.subr.mxu0 %v396
    %472 = vmatpush1.msra.mxu0 %v395
    %473 = vmatprep.subr.mxu0 %v398
    %474 = vmatpush1.msra.mxu0 %v397
    %475 = vmatprep.subr.mxu0 %v400
    %476 = vmatpush1.msra.mxu0 %v399
    %477 = vmatprep.subr.mxu0 %v402
    %478 = vmatpush1.msra.mxu0 %v401
    %479 = vmatprep.subr.mxu0 %v404
    %480 = vmatpush1.msra.mxu0 %v403
    %481 = vmatprep.subr.mxu0 %v406
    %482 = vmatpush1.msra.mxu0 %v405
    %483 = vmatprep.subr.mxu0 %v408
    %484 = vmatpush1.msra.mxu0 %v407
    %485 = vmatprep.subr.mxu0 %v410
    %486 = vmatpush1.msra.mxu0 %v409
    %487 = vmatprep.subr.mxu0 %v412
    %488 = vmatpush1.msra.mxu0 %v411
    %489 = vmatprep.subr.mxu0 %v414
    %490 = vmatpush1.msra.mxu0 %v413
    %491 = vmatprep.subr.mxu0 %v416
    %492 = vmatpush1.msra.mxu0 %v415
    %493 = vmatprep.subr.mxu0 %v418
    %494 = vmatpush1.msra.mxu0 %v417
    %495 = vmatprep.subr.mxu0 %v420
    %496 = vmatpush1.msra.mxu0 %v419
    %497 = vmatprep.subr.mxu0 %v422
    %498 = vmatpush1.msra.mxu0 %v421
    %499 = vmatprep.subr.mxu0 %v424
    %500 = vmatpush1.msra.mxu0 %v423
    %501 = vmatprep.subr.mxu0 %v426
    %502 = vmatpush1.msra.mxu0 %v425
    %503 = vmatprep.subr.mxu0 %v428
    %504 = vmatpush1.msra.mxu0 %v427
    %505 = vmatprep.subr.mxu0 %v430
    %506 = vmatpush1.msra.mxu0 %v429
    %507 = vmatprep.subr.mxu0 %v432
    %508 = vmatpush1.msra.mxu0 %v431
    %509 = vmatprep.subr.mxu0 %v434
    %510 = vmatpush1.msra.mxu0 %v433
    %511 = vmatprep.mubr.f32.mxu0 %v370
    %512 = vmatmul.mubr.f32.gmra.mrb[0].mxu0 %v369
    %v513 = vpop.f32.mrb[0].mxu0
    %v514 = vadd.f32 %v440, %v513
    %v515 = vpop.f32.mrb[0].mxu0
    %v516 = vadd.f32 %v444, %v515
    %517 = vdwg.mxu0
    %v518 = vmax.f32 %v514, 0.0
    %v519 = vmax.f32 %v516, 0.0
    %v520 = vld [vmem:[#allocation6] sm:$0xff]
    %v521 = vld [vmem:[#allocation6 + $0x8] sm:$0xff]
    %v522 = vld [vmem:[#allocation6 + $0x10] sm:$0xff]
    %v523 = vld [vmem:[#allocation6 + $0x18] sm:$0xff]
    %v524 = vld [vmem:[#allocation6 + $0x20] sm:$0xff]
    %v525 = vld [vmem:[#allocation6 + $0x28] sm:$0xff]
    %v526 = vld [vmem:[#allocation6 + $0x30] sm:$0xff]
    %v527 = vld [vmem:[#allocation6 + $0x38] sm:$0xff]
    %v528 = vld [vmem:[#allocation6 + $0x40] sm:$0xff]
    %v529 = vld [vmem:[#allocation6 + $0x48] sm:$0xff]
    %v530 = vld [vmem:[#allocation6 + $0x50] sm:$0xff]
    %v531 = vld [vmem:[#allocation6 + $0x58] sm:$0xff]
    %v532 = vld [vmem:[#allocation6 + $0x60] sm:$0xff]
    %v533 = vld [vmem:[#allocation6 + $0x68] sm:$0xff]
    %v534 = vld [vmem:[#allocation6 + $0x70] sm:$0xff]
    %v535 = vld [vmem:[#allocation6 + $0x78] sm:$0xff]
    %v536 = vld [vmem:[#allocation6 + $0x80] sm:$0xff]
    %v537 = vld [vmem:[#allocation6 + $0x88] sm:$0xff]
    %v538 = vld [vmem:[#allocation6 + $0x90] sm:$0xff]
    %v539 = vld [vmem:[#allocation6 + $0x98] sm:$0xff]
    %v540 = vld [vmem:[#allocation6 + $0xa0] sm:$0xff]
    %v541 = vld [vmem:[#allocation6 + $0xa8] sm:$0xff]
    %v542 = vld [vmem:[#allocation6 + $0xb0] sm:$0xff]
    %v543 = vld [vmem:[#allocation6 + $0xb8] sm:$0xff]
    %v544 = vld [vmem:[#allocation6 + $0xc0] sm:$0xff]
    %v545 = vld [vmem:[#allocation6 + $0xc8] sm:$0xff]
    %v546 = vld [vmem:[#allocation6 + $0xd0] sm:$0xff]
    %v547 = vld [vmem:[#allocation6 + $0xd8] sm:$0xff]
    %v548 = vld [vmem:[#allocation6 + $0xe0] sm:$0xff]
    %v549 = vld [vmem:[#allocation6 + $0xe8] sm:$0xff]
    %v550 = vld [vmem:[#allocation6 + $0xf0] sm:$0xff]
    %v551 = vld [vmem:[#allocation6 + $0xf8] sm:$0xff]
    %v552 = vld [vmem:[#allocation6 + $0x100] sm:$0xff]
    %v553 = vld [vmem:[#allocation6 + $0x108] sm:$0xff]
    %v554 = vld [vmem:[#allocation6 + $0x110] sm:$0xff]
    %v555 = vld [vmem:[#allocation6 + $0x118] sm:$0xff]
    %v556 = vld [vmem:[#allocation6 + $0x120] sm:$0xff]
    %v557 = vld [vmem:[#allocation6 + $0x128] sm:$0xff]
    %v558 = vld [vmem:[#allocation6 + $0x130] sm:$0xff]
    %v559 = vld [vmem:[#allocation6 + $0x138] sm:$0xff]
    %v560 = vld [vmem:[#allocation6 + $0x140] sm:$0xff]
    %v561 = vld [vmem:[#allocation6 + $0x148] sm:$0xff]
    %v562 = vld [vmem:[#allocation6 + $0x150] sm:$0xff]
    %v563 = vld [vmem:[#allocation6 + $0x158] sm:$0xff]
    %v564 = vld [vmem:[#allocation6 + $0x160] sm:$0xff]
    %v565 = vld [vmem:[#allocation6 + $0x168] sm:$0xff]
    %v566 = vld [vmem:[#allocation6 + $0x170] sm:$0xff]
    %v567 = vld [vmem:[#allocation6 + $0x178] sm:$0xff]
    %v568 = vld [vmem:[#allocation6 + $0x180] sm:$0xff]
    %v569 = vld [vmem:[#allocation6 + $0x188] sm:$0xff]
    %v570 = vld [vmem:[#allocation6 + $0x190] sm:$0xff]
    %v571 = vld [vmem:[#allocation6 + $0x198] sm:$0xff]
    %v572 = vld [vmem:[#allocation6 + $0x1a0] sm:$0xff]
    %v573 = vld [vmem:[#allocation6 + $0x1a8] sm:$0xff]
    %v574 = vld [vmem:[#allocation6 + $0x1b0] sm:$0xff]
    %v575 = vld [vmem:[#allocation6 + $0x1b8] sm:$0xff]
    %v576 = vld [vmem:[#allocation6 + $0x1c0] sm:$0xff]
    %v577 = vld [vmem:[#allocation6 + $0x1c8] sm:$0xff]
    %v578 = vld [vmem:[#allocation6 + $0x1d0] sm:$0xff]
    %v579 = vld [vmem:[#allocation6 + $0x1d8] sm:$0xff]
    %v580 = vld [vmem:[#allocation6 + $0x1e0] sm:$0xff]
    %v581 = vld [vmem:[#allocation6 + $0x1e8] sm:$0xff]
    %v582 = vld [vmem:[#allocation6 + $0x1f0] sm:$0xff]
    %v583 = vld [vmem:[#allocation6 + $0x1f8] sm:$0xff]
    %v584 = vld [vmem:[%s8] sm:$0x3]
    %v586 = vlaneseq
    %v587 = vshrl.u32 %v586, 7
    %v588 = vsub.s32 0, %v587
    %v589 = vrot.slane %v584, %v588
    %v590 = vlaneseq
    %v591 = vshrl.u32 %v590, 7
    %v592 = vsub.s32 1, %v591
    %v593 = vrot.slane %v584, %v592
    %596 = vmatprep.subr.mxu0 %v521
    %597 = vmatpush1.msra.mxu0 %v520
    %598 = vmatprep.subr.mxu0 %v523
    %599 = vmatpush1.msra.mxu0 %v522
    %600 = vmatprep.subr.mxu0 %v525
    %601 = vmatpush1.msra.mxu0 %v524
    %602 = vmatprep.subr.mxu0 %v527
    %603 = vmatpush1.msra.mxu0 %v526
    %604 = vmatprep.subr.mxu0 %v529
    %605 = vmatpush1.msra.mxu0 %v528
    %606 = vmatprep.subr.mxu0 %v531
    %607 = vmatpush1.msra.mxu0 %v530
    %608 = vmatprep.subr.mxu0 %v533
    %609 = vmatpush1.msra.mxu0 %v532
    %610 = vmatprep.subr.mxu0 %v535
    %611 = vmatpush1.msra.mxu0 %v534
    %612 = vmatprep.subr.mxu0 %v537
    %613 = vmatpush1.msra.mxu0 %v536
    %614 = vmatprep.subr.mxu0 %v539
    %615 = vmatpush1.msra.mxu0 %v538
    %616 = vmatprep.subr.mxu0 %v541
    %617 = vmatpush1.msra.mxu0 %v540
    %618 = vmatprep.subr.mxu0 %v543
    %619 = vmatpush1.msra.mxu0 %v542
    %620 = vmatprep.subr.mxu0 %v545
    %621 = vmatpush1.msra.mxu0 %v544
    %622 = vmatprep.subr.mxu0 %v547
    %623 = vmatpush1.msra.mxu0 %v546
    %624 = vmatprep.subr.mxu0 %v549
    %625 = vmatpush1.msra.mxu0 %v548
    %626 = vmatprep.subr.mxu0 %v551
    %627 = vmatpush1.msra.mxu0 %v550
    %628 = vmatprep.subr.mxu0 %v553
    %629 = vmatpush1.msra.mxu0 %v552
    %630 = vmatprep.subr.mxu0 %v555
    %631 = vmatpush1.msra.mxu0 %v554
    %632 = vmatprep.subr.mxu0 %v557
    %633 = vmatpush1.msra.mxu0 %v556
    %634 = vmatprep.subr.mxu0 %v559
    %635 = vmatpush1.msra.mxu0 %v558
    %636 = vmatprep.subr.mxu0 %v561
    %637 = vmatpush1.msra.mxu0 %v560
    %638 = vmatprep.subr.mxu0 %v563
    %639 = vmatpush1.msra.mxu0 %v562
    %640 = vmatprep.subr.mxu0 %v565
    %641 = vmatpush1.msra.mxu0 %v564
    %642 = vmatprep.subr.mxu0 %v567
    %643 = vmatpush1.msra.mxu0 %v566
    %644 = vmatprep.subr.mxu0 %v569
    %645 = vmatpush1.msra.mxu0 %v568
    %646 = vmatprep.subr.mxu0 %v571
    %647 = vmatpush1.msra.mxu0 %v570
    %648 = vmatprep.subr.mxu0 %v573
    %649 = vmatpush1.msra.mxu0 %v572
    %650 = vmatprep.subr.mxu0 %v575
    %651 = vmatpush1.msra.mxu0 %v574
    %652 = vmatprep.subr.mxu0 %v577
    %653 = vmatpush1.msra.mxu0 %v576
    %654 = vmatprep.subr.mxu0 %v579
    %655 = vmatpush1.msra.mxu0 %v578
    %656 = vmatprep.subr.mxu0 %v581
    %657 = vmatpush1.msra.mxu0 %v580
    %658 = vmatprep.subr.mxu0 %v583
    %659 = vmatpush1.msra.mxu0 %v582
    %660 = vmatprep.mubr.f32.mxu0 %v519
    %661 = vmatmul.mubr.f32.gmra.mrb[0].mxu0 %v518
    %v662 = vpop.f32.mrb[0].mxu0
    %v663 = vadd.f32 %v589, %v662
    %v664 = vpop.f32.mrb[0].mxu0
    %v665 = vadd.f32 %v593, %v664
    %666 = vdwg.mxu0
    %v667 = vmax.f32 %v663, 0.0
    %v668 = vmax.f32 %v665, 0.0
    %v669 = vld [vmem:[%s9] sm:$0xff]
    %v670 = vld [vmem:[%s9 + $0x8] sm:$0xff]
    %v671 = vld [vmem:[%s9 + $0x10] sm:$0xff]
    %v672 = vld [vmem:[%s9 + $0x18] sm:$0xff]
    %v673 = vld [vmem:[%s9 + $0x20] sm:$0xff]
    %v674 = vld [vmem:[%s9 + $0x28] sm:$0xff]
    %v675 = vld [vmem:[%s9 + $0x30] sm:$0xff]
    %v676 = vld [vmem:[%s9 + $0x38] sm:$0xff]
    %v677 = vld [vmem:[%s9 + $0x40] sm:$0xff]
    %v678 = vld [vmem:[%s9 + $0x48] sm:$0xff]
    %v679 = vld [vmem:[%s9 + $0x50] sm:$0xff]
    %v680 = vld [vmem:[%s9 + $0x58] sm:$0xff]
    %v681 = vld [vmem:[%s9 + $0x60] sm:$0xff]
    %v682 = vld [vmem:[%s9 + $0x68] sm:$0xff]
    %v683 = vld [vmem:[%s9 + $0x70] sm:$0xff]
    %v684 = vld [vmem:[%s9 + $0x78] sm:$0xff]
    %v685 = vld [vmem:[%s9 + $0x80] sm:$0xff]
    %v686 = vld [vmem:[%s9 + $0x88] sm:$0xff]
    %v687 = vld [vmem:[%s9 + $0x90] sm:$0xff]
    %v688 = vld [vmem:[%s9 + $0x98] sm:$0xff]
    %v689 = vld [vmem:[%s9 + $0xa0] sm:$0xff]
    %v690 = vld [vmem:[%s9 + $0xa8] sm:$0xff]
    %v691 = vld [vmem:[%s9 + $0xb0] sm:$0xff]
    %v692 = vld [vmem:[%s9 + $0xb8] sm:$0xff]
    %v693 = vld [vmem:[%s9 + $0xc0] sm:$0xff]
    %v694 = vld [vmem:[%s9 + $0xc8] sm:$0xff]
    %v695 = vld [vmem:[%s9 + $0xd0] sm:$0xff]
    %v696 = vld [vmem:[%s9 + $0xd8] sm:$0xff]
    %v697 = vld [vmem:[%s9 + $0xe0] sm:$0xff]
    %v698 = vld [vmem:[%s9 + $0xe8] sm:$0xff]
    %v699 = vld [vmem:[%s9 + $0xf0] sm:$0xff]
    %v700 = vld [vmem:[%s9 + $0xf8] sm:$0xff]
    %v701 = vld [vmem:[%s10] sm:$0x1]
    %v703 = vlaneseq
    %v704 = vshrl.u32 %v703, 7
    %v705 = vsub.s32 0, %v704
    %v706 = vrot.slane %v701, %v705
    %708 = vmatprep.subr.mxu0 0.0
    %709 = vmatpush1.msra.mxu0 %v669
    %710 = vmatprep.subr.mxu0 0.0
    %711 = vmatpush1.msra.mxu0 %v670
    %712 = vmatprep.subr.mxu0 0.0
    %713 = vmatpush1.msra.mxu0 %v671
    %714 = vmatprep.subr.mxu0 0.0
    %715 = vmatpush1.msra.mxu0 %v672
    %716 = vmatprep.subr.mxu0 0.0
    %717 = vmatpush1.msra.mxu0 %v673
    %718 = vmatprep.subr.mxu0 0.0
    %719 = vmatpush1.msra.mxu0 %v674
    %720 = vmatprep.subr.mxu0 0.0
    %721 = vmatpush1.msra.mxu0 %v675
    %722 = vmatprep.subr.mxu0 0.0
    %723 = vmatpush1.msra.mxu0 %v676
    %724 = vmatprep.subr.mxu0 0.0
    %725 = vmatpush1.msra.mxu0 %v677
    %726 = vmatprep.subr.mxu0 0.0
    %727 = vmatpush1.msra.mxu0 %v678
    %728 = vmatprep.subr.mxu0 0.0
    %729 = vmatpush1.msra.mxu0 %v679
    %730 = vmatprep.subr.mxu0 0.0
    %731 = vmatpush1.msra.mxu0 %v680
    %732 = vmatprep.subr.mxu0 0.0
    %733 = vmatpush1.msra.mxu0 %v681
    %734 = vmatprep.subr.mxu0 0.0
    %735 = vmatpush1.msra.mxu0 %v682
    %736 = vmatprep.subr.mxu0 0.0
    %737 = vmatpush1.msra.mxu0 %v683
    %738 = vmatprep.subr.mxu0 0.0
    %739 = vmatpush1.msra.mxu0 %v684
    %740 = vmatprep.subr.mxu0 0.0
    %741 = vmatpush1.msra.mxu0 %v685
    %742 = vmatprep.subr.mxu0 0.0
    %743 = vmatpush1.msra.mxu0 %v686
    %744 = vmatprep.subr.mxu0 0.0
    %745 = vmatpush1.msra.mxu0 %v687
    %746 = vmatprep.subr.mxu0 0.0
    %747 = vmatpush1.msra.mxu0 %v688
    %748 = vmatprep.subr.mxu0 0.0
    %749 = vmatpush1.msra.mxu0 %v689
    %750 = vmatprep.subr.mxu0 0.0
    %751 = vmatpush1.msra.mxu0 %v690
    %752 = vmatprep.subr.mxu0 0.0
    %753 = vmatpush1.msra.mxu0 %v691
    %754 = vmatprep.subr.mxu0 0.0
    %755 = vmatpush1.msra.mxu0 %v692
    %756 = vmatprep.subr.mxu0 0.0
    %757 = vmatpush1.msra.mxu0 %v693
    %758 = vmatprep.subr.mxu0 0.0
    %759 = vmatpush1.msra.mxu0 %v694
    %760 = vmatprep.subr.mxu0 0.0
    %761 = vmatpush1.msra.mxu0 %v695
    %762 = vmatprep.subr.mxu0 0.0
    %763 = vmatpush1.msra.mxu0 %v696
    %764 = vmatprep.subr.mxu0 0.0
    %765 = vmatpush1.msra.mxu0 %v697
    %766 = vmatprep.subr.mxu0 0.0
    %767 = vmatpush1.msra.mxu0 %v698
    %768 = vmatprep.subr.mxu0 0.0
    %769 = vmatpush1.msra.mxu0 %v699
    %770 = vmatprep.subr.mxu0 0.0
    %771 = vmatpush1.msra.mxu0 %v700
    %772 = vmatprep.mubr.f32.mxu0 %v668
    %773 = vmatmul.mubr.f32.gmra.mrb[0].mxu0 %v667
    %v774 = vpop.f32.mrb[0].mxu0
    %v775 = vadd.f32 %v706, %v774
    %v776 = vpop.f32.mrb[0].mxu0
    %777 = vdwg.mxu0
    %v778 = vmax.f32 %v775, 0.0
    %v779 = vld [vmem:[%s11] sm:$0xff]
    %v780 = vld [vmem:[%s11 + $0x8] sm:$0xff]
    %782 = vset.pattern.permute.xlu0 0
    %783 = vperm.xlu0 %782, %v778
    %v784 = vpop.permute.xlu0 %783
    %v786 = vlaneseq
    %v787 = vshrl.u32 %v786, 7
    %v788 = vsub.s32 0, %v787
    %v789 = vrot.slane %v779, %v788
    %v790 = vmul.f32 %v784, %v789
    %791 = vset.pattern.permute.xlu0 1
    %792 = vperm.xlu0 %791, %v778
    %v793 = vpop.permute.xlu0 %792
    %v795 = vlaneseq
    %v796 = vshrl.u32 %v795, 7
    %v797 = vsub.s32 1, %v796
    %v798 = vrot.slane %v779, %v797
    %v799 = vmul.f32 %v793, %v798
    %v800 = vadd.f32 %v790, %v799
    %801 = vset.pattern.permute.xlu0 2
    %802 = vperm.xlu0 %801, %v778
    %v803 = vpop.permute.xlu0 %802
    %v805 = vlaneseq
    %v806 = vshrl.u32 %v805, 7
    %v807 = vsub.s32 2, %v806
    %v808 = vrot.slane %v779, %v807
    %v809 = vmul.f32 %v803, %v808
    %v810 = vadd.f32 %v800, %v809
    %811 = vset.pattern.permute.xlu0 3
    %812 = vperm.xlu0 %811, %v778
    %v813 = vpop.permute.xlu0 %812
    %v815 = vlaneseq
    %v816 = vshrl.u32 %v815, 7
    %v817 = vsub.s32 3, %v816
    %v818 = vrot.slane %v779, %v817
    %v819 = vmul.f32 %v813, %v818
    %v820 = vadd.f32 %v810, %v819
    %821 = vset.pattern.permute.xlu0 4
    %822 = vperm.xlu0 %821, %v778
    %v823 = vpop.permute.xlu0 %822
    %v825 = vlaneseq
    %v826 = vshrl.u32 %v825, 7
    %v827 = vsub.s32 4, %v826
    %v828 = vrot.slane %v779, %v827
    %v829 = vmul.f32 %v823, %v828
    %v830 = vadd.f32 %v820, %v829
    %831 = vset.pattern.permute.xlu0 5
    %832 = vperm.xlu0 %831, %v778
    %v833 = vpop.permute.xlu0 %832
    %v835 = vlaneseq
    %v836 = vshrl.u32 %v835, 7
    %v837 = vsub.s32 5, %v836
    %v838 = vrot.slane %v779, %v837
    %v839 = vmul.f32 %v833, %v838
    %v840 = vadd.f32 %v830, %v839
    %841 = vset.pattern.permute.xlu0 6
    %842 = vperm.xlu0 %841, %v778
    %v843 = vpop.permute.xlu0 %842
    %v845 = vlaneseq
    %v846 = vshrl.u32 %v845, 7
    %v847 = vsub.s32 6, %v846
    %v848 = vrot.slane %v779, %v847
    %v849 = vmul.f32 %v843, %v848
    %v850 = vadd.f32 %v840, %v849
    %851 = vset.pattern.permute.xlu0 7
    %852 = vperm.xlu0 %851, %v778
    %v853 = vpop.permute.xlu0 %852
    %v855 = vlaneseq
    %v856 = vshrl.u32 %v855, 7
    %v857 = vsub.s32 7, %v856
    %v858 = vrot.slane %v779, %v857
    %v859 = vmul.f32 %v853, %v858
    %v860 = vadd.f32 %v850, %v859
    %861 = vset.pattern.permute.xlu0 8
    %862 = vperm.xlu0 %861, %v778
    %v863 = vpop.permute.xlu0 %862
    %v865 = vlaneseq
    %v866 = vshrl.u32 %v865, 7
    %v867 = vsub.s32 0, %v866
    %v868 = vrot.slane %v780, %v867
    %v869 = vmul.f32 %v863, %v868
    %v870 = vadd.f32 %v860, %v869
    %871 = vset.pattern.permute.xlu0 9
    %872 = vperm.xlu0 %871, %v778
    %v873 = vpop.permute.xlu0 %872
    %v875 = vlaneseq
    %v876 = vshrl.u32 %v875, 7
    %v877 = vsub.s32 1, %v876
    %v878 = vrot.slane %v780, %v877
    %v879 = vmul.f32 %v873, %v878
    %v880 = vadd.f32 %v870, %v879
    %881 = vset.pattern.permute.xlu0 10
    %882 = vperm.xlu0 %881, %v778
    %v883 = vpop.permute.xlu0 %882
    %v885 = vlaneseq
    %v886 = vshrl.u32 %v885, 7
    %v887 = vsub.s32 2, %v886
    %v888 = vrot.slane %v780, %v887
    %v889 = vmul.f32 %v883, %v888
    %v890 = vadd.f32 %v880, %v889
    %891 = vset.pattern.permute.xlu0 11
    %892 = vperm.xlu0 %891, %v778
    %v893 = vpop.permute.xlu0 %892
    %v895 = vlaneseq
    %v896 = vshrl.u32 %v895, 7
    %v897 = vsub.s32 3, %v896
    %v898 = vrot.slane %v780, %v897
    %v899 = vmul.f32 %v893, %v898
    %v900 = vadd.f32 %v890, %v899
    %901 = vset.pattern.permute.xlu0 12
    %902 = vperm.xlu0 %901, %v778
    %v903 = vpop.permute.xlu0 %902
    %v905 = vlaneseq
    %v906 = vshrl.u32 %v905, 7
    %v907 = vsub.s32 4, %v906
    %v908 = vrot.slane %v780, %v907
    %v909 = vmul.f32 %v903, %v908
    %v910 = vadd.f32 %v900, %v909
    %911 = vset.pattern.permute.xlu0 13
    %912 = vperm.xlu0 %911, %v778
    %v913 = vpop.permute.xlu0 %912
    %v915 = vlaneseq
    %v916 = vshrl.u32 %v915, 7
    %v917 = vsub.s32 5, %v916
    %v918 = vrot.slane %v780, %v917
    %v919 = vmul.f32 %v913, %v918
    %v920 = vadd.f32 %v910, %v919
    %921 = vset.pattern.permute.xlu0 14
    %922 = vperm.xlu0 %921, %v778
    %v923 = vpop.permute.xlu0 %922
    %v925 = vlaneseq
    %v926 = vshrl.u32 %v925, 7
    %v927 = vsub.s32 6, %v926
    %v928 = vrot.slane %v780, %v927
    %v929 = vmul.f32 %v923, %v928
    %v930 = vadd.f32 %v920, %v929
    %931 = vset.pattern.permute.xlu0 15
    %932 = vperm.xlu0 %931, %v778
    %v933 = vpop.permute.xlu0 %932
    %v935 = vlaneseq
    %v936 = vshrl.u32 %v935, 7
    %v937 = vsub.s32 7, %v936
    %v938 = vrot.slane %v780, %v937
    %v939 = vmul.f32 %v933, %v938
    %v940 = vadd.f32 %v930, %v939
    %v941 = vld [vmem:[%s12] sm:$0x1]
    %v943 = vlaneseq
    %v944 = vshrl.u32 %v943, 7
    %v945 = vsub.s32 0, %v944
    %v946 = vrot.slane %v941, %v945
    %v948 = vadd.f32 %v940, %v946
    %v949 = vmax.f32 %v948, 0.0
    %v950 = vld [vmem:[%s13] sm:$0xff]
    %952 = vset.pattern.permute.xlu0 0
    %953 = vperm.xlu0 %952, %v949
    %v954 = vpop.permute.xlu0 %953
    %v956 = vlaneseq
    %v957 = vshrl.u32 %v956, 7
    %v958 = vsub.s32 0, %v957
    %v959 = vrot.slane %v950, %v958
    %v960 = vmul.f32 %v954, %v959
    %961 = vset.pattern.permute.xlu0 1
    %962 = vperm.xlu0 %961, %v949
    %v963 = vpop.permute.xlu0 %962
    %v965 = vlaneseq
    %v966 = vshrl.u32 %v965, 7
    %v967 = vsub.s32 1, %v966
    %v968 = vrot.slane %v950, %v967
    %v969 = vmul.f32 %v963, %v968
    %v970 = vadd.f32 %v960, %v969
    %971 = vset.pattern.permute.xlu0 2
    %972 = vperm.xlu0 %971, %v949
    %v973 = vpop.permute.xlu0 %972
    %v975 = vlaneseq
    %v976 = vshrl.u32 %v975, 7
    %v977 = vsub.s32 2, %v976
    %v978 = vrot.slane %v950, %v977
    %v979 = vmul.f32 %v973, %v978
    %v980 = vadd.f32 %v970, %v979
    %981 = vset.pattern.permute.xlu0 3
    %982 = vperm.xlu0 %981, %v949
    %v983 = vpop.permute.xlu0 %982
    %v985 = vlaneseq
    %v986 = vshrl.u32 %v985, 7
    %v987 = vsub.s32 3, %v986
    %v988 = vrot.slane %v950, %v987
    %v989 = vmul.f32 %v983, %v988
    %v990 = vadd.f32 %v980, %v989
    %991 = vset.pattern.permute.xlu0 4
    %992 = vperm.xlu0 %991, %v949
    %v993 = vpop.permute.xlu0 %992
    %v995 = vlaneseq
    %v996 = vshrl.u32 %v995, 7
    %v997 = vsub.s32 4, %v996
    %v998 = vrot.slane %v950, %v997
    %v999 = vmul.f32 %v993, %v998
    %v1000 = vadd.f32 %v990, %v999
    %1001 = vset.pattern.permute.xlu0 5
    %1002 = vperm.xlu0 %1001, %v949
    %v1003 = vpop.permute.xlu0 %1002
    %v1005 = vlaneseq
    %v1006 = vshrl.u32 %v1005, 7
    %v1007 = vsub.s32 5, %v1006
    %v1008 = vrot.slane %v950, %v1007
    %v1009 = vmul.f32 %v1003, %v1008
    %v1010 = vadd.f32 %v1000, %v1009
    %1011 = vset.pattern.permute.xlu0 6
    %1012 = vperm.xlu0 %1011, %v949
    %v1013 = vpop.permute.xlu0 %1012
    %v1015 = vlaneseq
    %v1016 = vshrl.u32 %v1015, 7
    %v1017 = vsub.s32 6, %v1016
    %v1018 = vrot.slane %v950, %v1017
    %v1019 = vmul.f32 %v1013, %v1018
    %v1020 = vadd.f32 %v1010, %v1019
    %1021 = vset.pattern.permute.xlu0 7
    %1022 = vperm.xlu0 %1021, %v949
    %v1023 = vpop.permute.xlu0 %1022
    %v1025 = vlaneseq
    %v1026 = vshrl.u32 %v1025, 7
    %v1027 = vsub.s32 7, %v1026
    %v1028 = vrot.slane %v950, %v1027
    %v1029 = vmul.f32 %v1023, %v1028
    %v1030 = vadd.f32 %v1020, %v1029
    %v1031 = vld [vmem:[%s14] sm:$0x1]
    %v1033 = vlaneseq
    %v1034 = vshrl.u32 %v1033, 7
    %v1035 = vsub.s32 0, %v1034
    %v1036 = vrot.slane %v1031, %v1035
    %v1038 = vadd.f32 %v1030, %v1036
    %v1039 = vmax.f32 %v1038, 0.0
    %v1040 = vld [vmem:[%s15] sm:$0xff]
    %1042 = vset.pattern.permute.xlu0 0
    %1043 = vperm.xlu0 %1042, %v1039
    %v1044 = vpop.permute.xlu0 %1043
    %v1046 = vlaneseq
    %v1047 = vshrl.u32 %v1046, 7
    %v1048 = vsub.s32 0, %v1047
    %v1049 = vrot.slane %v1040, %v1048
    %v1050 = vmul.f32 %v1044, %v1049
    %1051 = vset.pattern.permute.xlu0 1
    %1052 = vperm.xlu0 %1051, %v1039
    %v1053 = vpop.permute.xlu0 %1052
    %v1055 = vlaneseq
    %v1056 = vshrl.u32 %v1055, 7
    %v1057 = vsub.s32 1, %v1056
    %v1058 = vrot.slane %v1040, %v1057
    %v1059 = vmul.f32 %v1053, %v1058
    %v1060 = vadd.f32 %v1050, %v1059
    %1061 = vset.pattern.permute.xlu0 2
    %1062 = vperm.xlu0 %1061, %v1039
    %v1063 = vpop.permute.xlu0 %1062
    %v1065 = vlaneseq
    %v1066 = vshrl.u32 %v1065, 7
    %v1067 = vsub.s32 2, %v1066
    %v1068 = vrot.slane %v1040, %v1067
    %v1069 = vmul.f32 %v1063, %v1068
    %v1070 = vadd.f32 %v1060, %v1069
    %1071 = vset.pattern.permute.xlu0 3
    %1072 = vperm.xlu0 %1071, %v1039
    %v1073 = vpop.permute.xlu0 %1072
    %v1075 = vlaneseq
    %v1076 = vshrl.u32 %v1075, 7
    %v1077 = vsub.s32 3, %v1076
    %v1078 = vrot.slane %v1040, %v1077
    %v1079 = vmul.f32 %v1073, %v1078
    %v1080 = vadd.f32 %v1070, %v1079
    %1081 = vset.pattern.permute.xlu0 4
    %1082 = vperm.xlu0 %1081, %v1039
    %v1083 = vpop.permute.xlu0 %1082
    %v1085 = vlaneseq
    %v1086 = vshrl.u32 %v1085, 7
    %v1087 = vsub.s32 4, %v1086
    %v1088 = vrot.slane %v1040, %v1087
    %v1089 = vmul.f32 %v1083, %v1088
    %v1090 = vadd.f32 %v1080, %v1089
    %1091 = vset.pattern.permute.xlu0 5
    %1092 = vperm.xlu0 %1091, %v1039
    %v1093 = vpop.permute.xlu0 %1092
    %v1095 = vlaneseq
    %v1096 = vshrl.u32 %v1095, 7
    %v1097 = vsub.s32 5, %v1096
    %v1098 = vrot.slane %v1040, %v1097
    %v1099 = vmul.f32 %v1093, %v1098
    %v1100 = vadd.f32 %v1090, %v1099
    %1101 = vset.pattern.permute.xlu0 6
    %1102 = vperm.xlu0 %1101, %v1039
    %v1103 = vpop.permute.xlu0 %1102
    %v1105 = vlaneseq
    %v1106 = vshrl.u32 %v1105, 7
    %v1107 = vsub.s32 6, %v1106
    %v1108 = vrot.slane %v1040, %v1107
    %v1109 = vmul.f32 %v1103, %v1108
    %v1110 = vadd.f32 %v1100, %v1109
    %1111 = vset.pattern.permute.xlu0 7
    %1112 = vperm.xlu0 %1111, %v1039
    %v1113 = vpop.permute.xlu0 %1112
    %v1115 = vlaneseq
    %v1116 = vshrl.u32 %v1115, 7
    %v1117 = vsub.s32 7, %v1116
    %v1118 = vrot.slane %v1040, %v1117
    %v1119 = vmul.f32 %v1113, %v1118
    %v1120 = vadd.f32 %v1110, %v1119
    %v1121 = vld [vmem:[%s16] sm:$0x1]
    %v1123 = vlaneseq
    %v1124 = vshrl.u32 %v1123, 7
    %v1125 = vsub.s32 0, %v1124
    %v1126 = vrot.slane %v1121, %v1125
    %v1128 = vadd.f32 %v1120, %v1126
    %v1129 = vld [vmem:[%s17] sm:$0x3]
    %v1130 = vlaneseq
    %v1131 = vshrl.u32 %v1130, 7
    %v1132 = vsub.s32 0, %v1131
    %v1133 = vrot.slane %v1129, %v1132
    %v1134 = vmul.f32 %v156, %v1133
    %v1135 = vadd.f32 %v1128, %v1134
    %v1136 = vlaneseq
    %v1137 = vshrl.u32 %v1136, 7
    %v1138 = vsub.s32 1, %v1137
    %v1139 = vrot.slane %v1129, %v1138
    %v1140 = vmul.f32 %v182, %v1139
    %v1141 = vadd.f32 %v1135, %v1140
    %vm1142 = vcmask 15360
    %1143 = vst.msk [vmem:[%s18] sm:$0xff] %vm1142, %v1141
    // Predicated region
    $region86: #{tpu_custom_call.1} parent=1 // pred_check
      _
    $region87: #{tpu_custom_call.1} parent=1 // pred_check_branch
      %1145 = sbr.rel (0) target = $region89
    $region88: #{tpu_custom_call.1} parent=1 // pred_region
      _
    $region89: #{tpu_custom_call.1} parent=1 // pred_fallthru
      _
    // Predicated region
    $region90: #{tpu_custom_call.1} parent=1 // pred_check
      _
    $region91: #{tpu_custom_call.1} parent=1 // pred_check_branch
      %1147 = sbr.rel (0) target = $region93
    $region92: #{tpu_custom_call.1} parent=1 // pred_region
      _
    $region93: #{tpu_custom_call.1} parent=1 // pred_fallthru
      _
    %1148 = vsyncpa [#allocation3], 1
    %1149 = vsyncpa [#allocation5], 1

</llo_original>
